<compile_context>
chip_gen: v7x
topology: tpu7x:2x2x1
jax: 0.10.0
libtpu: 0.0.40
codegen_flags: <defaults>
</compile_context>

<pallas_src>
import jax
import jax.numpy as jnp
from jax.experimental import pallas as pl
from jax.experimental.pallas import tpu as pltpu

K_IN = 784     # 28*28 flattened pixels
N_OUT = 10
N_PAD = 128    # lane-dense output width for the final store (wrapper slices [:, :10])


def mlp_kernel(x_ref, w1_ref, b1_ref, w2_ref, b2_ref, w3_ref, b3_ref, o_ref):
    # x arrives f32; cast to bf16 in-kernel (cheaper end-to-end than a wrapper cast pass).
    x = x_ref[...].astype(jnp.bfloat16)

    # Layer 1: (TB, 784) @ (784, 512) + (1, 512), ReLU   (bf16 operands, f32 accumulate)
    h1 = jnp.dot(x, w1_ref[...], preferred_element_type=jnp.float32)
    h1 = jnp.maximum(h1 + b1_ref[...], 0.0).astype(jnp.bfloat16)

    # Layer 2: (TB, 512) @ (512, 256) + (1, 256), ReLU
    h2 = jnp.dot(h1, w2_ref[...], preferred_element_type=jnp.float32)
    h2 = jnp.maximum(h2 + b2_ref[...], 0.0).astype(jnp.bfloat16)

    # Layer 3: (TB, 256) @ (256, 128) + (1, 128)  (logits, lane-dense padded, no activation)
    h3 = jnp.dot(h2, w3_ref[...], preferred_element_type=jnp.float32)
    o_ref[...] = (h3 + b3_ref[...]).astype(o_ref.dtype)


def _round_up(n, m):
    return (n + m - 1) // m * m


def prepare_params(params):
    """One-time weight prep: bf16 cast + lane-dense pad of the last layer. Call once."""
    w1, b1, w2, b2, w3, b3 = params  # f32, (in, out) layout, biases (1, out)
    w1b = w1.astype(jnp.bfloat16)                                   # (784, 512)
    w2b = w2.astype(jnp.bfloat16)                                   # (512, 256)
    w3b = jnp.pad(w3, ((0, 0), (0, N_PAD - N_OUT))).astype(jnp.bfloat16)  # (256, 128)
    b3p = jnp.pad(b3, ((0, 0), (0, N_PAD - N_OUT)))                 # (1, 128) f32
    return (w1b, b1, w2b, b2, w3b, b3p)


def fashion_mnist_forward(x_nchw, prepared_params, *, block_b=1024):
    """x_nchw: (B, 1, 28, 28) float32. prepared_params: output of prepare_params().
    Returns logits (B, 10) float32."""
    w1b, b1, w2b, b2, w3b, b3p = prepared_params
    B = x_nchw.shape[0]
    x = x_nchw.reshape(B, K_IN)  # nn.Flatten -> (B, 784), stays f32

    # --- batch tiling ------------------------------------------------------
    # TB multiple of 16 (bf16 sublane packing); for B >= 32 force >= 2 grid steps so the
    # "parallel" batch axis actually gives v7x's two TensorCores work to split.
    B16 = _round_up(B, 16)
    target_tb = _round_up(pl.cdiv(B16, 2), 16) if B16 >= 32 else B16
    TB = min(block_b, target_tb)
    B_pad = _round_up(B16, TB)
    if B_pad != B:
        x = jnp.pad(x, ((0, B_pad - B), (0, 0)))

    def const_spec(shape):
        # whole-array block, same block index every grid step -> DMA'd once, stays resident
        return pl.BlockSpec(shape, lambda i: tuple(0 for _ in shape))

    out = pl.pallas_call(
        mlp_kernel,
        out_shape=jax.ShapeDtypeStruct((B_pad, N_PAD), jnp.float32),
        grid=(B_pad // TB,),
        in_specs=[
            pl.BlockSpec((TB, K_IN), lambda i: (i, 0)),    # x: f32, tiled over batch
            const_spec(w1b.shape), const_spec(b1.shape),
            const_spec(w2b.shape), const_spec(b2.shape),
            const_spec(w3b.shape), const_spec(b3p.shape),
        ],
        out_specs=pl.BlockSpec((TB, N_PAD), lambda i: (i, 0)),
        compiler_params=pltpu.CompilerParams(
            dimension_semantics=("parallel",),       # megacore sharding on v7x
            vmem_limit_bytes=32 * 1024 * 1024,       # headroom for TB=1024 on v5e's 16 MiB default
        ),
    )(x, w1b, b1, w2b, b2, w3b, b3p)

    return out[:B, :N_OUT]


def init_params(key):
    """Deterministic xavier-uniform-like init (matches init_weights_2 semantics)."""
    def xavier(k, fan_in, fan_out):
        limit = (6.0 / (fan_in + fan_out)) ** 0.5
        # stored as (in_features, out_features) == torch weight transposed
        return jax.random.uniform(k, (fan_in, fan_out), jnp.float32, -limit, limit)

    k1, k2, k3 = jax.random.split(key, 3)
    w1 = xavier(k1, 784, 512)
    b1 = jnp.zeros((1, 512), jnp.float32)
    w2 = xavier(k2, 512, 256)
    b2 = jnp.zeros((1, 256), jnp.float32)
    w3 = xavier(k3, 256, 10)
    b3 = jnp.zeros((1, 10), jnp.float32)
    return (w1, b1, w2, b2, w3, b3)


def reference_forward(x_nchw, params):
    """Same math as the kernel (bf16 matmul operands, f32 accumulation), pure JAX."""
    w1, b1, w2, b2, w3, b3 = params
    x = x_nchw.reshape(x_nchw.shape[0], -1).astype(jnp.bfloat16)
    h1 = jnp.maximum(
        jnp.dot(x, w1.astype(jnp.bfloat16), preferred_element_type=jnp.float32) + b1,
        0.0).astype(jnp.bfloat16)
    h2 = jnp.maximum(
        jnp.dot(h1, w2.astype(jnp.bfloat16), preferred_element_type=jnp.float32) + b2,
        0.0).astype(jnp.bfloat16)
    return jnp.dot(h2, w3.astype(jnp.bfloat16), preferred_element_type=jnp.float32) + b3


# TODO(synk): l2_regularization / init_weights_1 are training-time utilities, not part of
# the forward pass, so they are not translated to Pallas.

if __name__ == "__main__":
    key = jax.random.PRNGKey(0)
    k_x, k_p = jax.random.split(key)

    B = 8  # small demo batch
    x = jax.random.normal(k_x, (B, 1, 28, 28), jnp.float32)  # NCHW like FashionMNIST
    params = init_params(k_p)
    prepared = prepare_params(params)          # one-time weight cast/pad (not per call)

    forward = jax.jit(lambda xi, pp: fashion_mnist_forward(xi, pp))
    out = forward(x, prepared)
    out = jax.block_until_ready(out)

    ref = reference_forward(x, params)
    assert out.shape == (B, 10), out.shape
    assert jnp.allclose(out, ref, atol=1e-3, rtol=1e-3), "mismatch vs reference"

    print("KERNEL_OK")
</pallas_src>

<mosaic_0001>
module attributes {stable_mosaic.version = 11 : i64} {
  func.func @mlp_kernel(%arg0: i32, %arg1: memref<16x784xf32, #tpu.memory_space<vmem>>, %arg2: memref<784x512xbf16, #tpu.memory_space<vmem>>, %arg3: memref<1x512xf32, #tpu.memory_space<vmem>>, %arg4: memref<512x256xbf16, #tpu.memory_space<vmem>>, %arg5: memref<1x256xf32, #tpu.memory_space<vmem>>, %arg6: memref<256x128xbf16, #tpu.memory_space<vmem>>, %arg7: memref<1x128xf32, #tpu.memory_space<vmem>>, %arg8: memref<16x128xf32, #tpu.memory_space<vmem>>) attributes {dimension_semantics = [#tpu.dimension_semantics<parallel>], iteration_bounds = array<i64: 1>, scalar_prefetch = 0 : i64, scratch_operands = 0 : i64, tpu.core_type = #tpu.core_type<tc>, window_params = [{transform_indices = @transform_0, window_bounds = array<i64: 16, 784>}, {pipeline_mode = #tpu.pipeline_mode<synchronous>, transform_indices = @transform_1, window_bounds = array<i64: 784, 512>}, {pipeline_mode = #tpu.pipeline_mode<synchronous>, transform_indices = @transform_2, window_bounds = array<i64: 1, 512>}, {pipeline_mode = #tpu.pipeline_mode<synchronous>, transform_indices = @transform_3, window_bounds = array<i64: 512, 256>}, {pipeline_mode = #tpu.pipeline_mode<synchronous>, transform_indices = @transform_4, window_bounds = array<i64: 1, 256>}, {pipeline_mode = #tpu.pipeline_mode<synchronous>, transform_indices = @transform_5, window_bounds = array<i64: 256, 128>}, {pipeline_mode = #tpu.pipeline_mode<synchronous>, transform_indices = @transform_6, window_bounds = array<i64: 1, 128>}, {transform_indices = @transform_7, window_bounds = array<i64: 16, 128>}]} {
    %c0 = arith.constant 0 : index
    %c0_0 = arith.constant 0 : index
    %0 = vector.load %arg1[%c0, %c0_0] : memref<16x784xf32, #tpu.memory_space<vmem>>, vector<16x784xf32>
    %1 = arith.truncf %0 : vector<16x784xf32> to vector<16x784xbf16>
    %c0_1 = arith.constant 0 : index
    %c0_2 = arith.constant 0 : index
    %2 = vector.load %arg2[%c0_1, %c0_2] : memref<784x512xbf16, #tpu.memory_space<vmem>>, vector<784x512xbf16>
    %cst = arith.constant dense<0.000000e+00> : vector<16x512xf32>
    %3 = tpu.matmul %1, %2, %cst {dimension_numbers = #tpu.dot_dimension_numbers<[1], [0], [0], [1], [0, 0, 1, 1], [], []>} : vector<16x784xbf16>, vector<784x512xbf16>, vector<16x512xf32> -> vector<16x512xf32>
    %c0_3 = arith.constant 0 : index
    %c0_4 = arith.constant 0 : index
    %4 = vector.load %arg3[%c0_3, %c0_4] : memref<1x512xf32, #tpu.memory_space<vmem>>, vector<1x512xf32>
    %5 = vector.broadcast %4 : vector<1x512xf32> to vector<16x512xf32>
    %6 = arith.addf %3, %5 : vector<16x512xf32>
    %cst_5 = arith.constant 0.000000e+00 : f32
    %7 = vector.broadcast %cst_5 : f32 to vector<16x512xf32>
    %8 = arith.maximumf %6, %7 : vector<16x512xf32>
    %9 = arith.truncf %8 : vector<16x512xf32> to vector<16x512xbf16>
    %c0_6 = arith.constant 0 : index
    %c0_7 = arith.constant 0 : index
    %10 = vector.load %arg4[%c0_6, %c0_7] : memref<512x256xbf16, #tpu.memory_space<vmem>>, vector<512x256xbf16>
    %cst_8 = arith.constant dense<0.000000e+00> : vector<16x256xf32>
    %11 = tpu.matmul %9, %10, %cst_8 {dimension_numbers = #tpu.dot_dimension_numbers<[1], [0], [0], [1], [0, 0, 1, 1], [], []>} : vector<16x512xbf16>, vector<512x256xbf16>, vector<16x256xf32> -> vector<16x256xf32>
    %c0_9 = arith.constant 0 : index
    %c0_10 = arith.constant 0 : index
    %12 = vector.load %arg5[%c0_9, %c0_10] : memref<1x256xf32, #tpu.memory_space<vmem>>, vector<1x256xf32>
    %13 = vector.broadcast %12 : vector<1x256xf32> to vector<16x256xf32>
    %14 = arith.addf %11, %13 : vector<16x256xf32>
    %cst_11 = arith.constant 0.000000e+00 : f32
    %15 = vector.broadcast %cst_11 : f32 to vector<16x256xf32>
    %16 = arith.maximumf %14, %15 : vector<16x256xf32>
    %17 = arith.truncf %16 : vector<16x256xf32> to vector<16x256xbf16>
    %c0_12 = arith.constant 0 : index
    %c0_13 = arith.constant 0 : index
    %18 = vector.load %arg6[%c0_12, %c0_13] : memref<256x128xbf16, #tpu.memory_space<vmem>>, vector<256x128xbf16>
    %cst_14 = arith.constant dense<0.000000e+00> : vector<16x128xf32>
    %19 = tpu.matmul %17, %18, %cst_14 {dimension_numbers = #tpu.dot_dimension_numbers<[1], [0], [0], [1], [0, 0, 1, 1], [], []>} : vector<16x256xbf16>, vector<256x128xbf16>, vector<16x128xf32> -> vector<16x128xf32>
    %c0_15 = arith.constant 0 : index
    %c0_16 = arith.constant 0 : index
    %20 = vector.load %arg7[%c0_15, %c0_16] : memref<1x128xf32, #tpu.memory_space<vmem>>, vector<1x128xf32>
    %21 = vector.broadcast %20 : vector<1x128xf32> to vector<16x128xf32>
    %22 = arith.addf %19, %21 : vector<16x128xf32>
    %c0_17 = arith.constant 0 : index
    %c0_18 = arith.constant 0 : index
    %23 = vector.load %arg8[%c0_17, %c0_18] : memref<16x128xf32, #tpu.memory_space<vmem>>, vector<16x128xf32>
    tpu.vector_store %arg8[%c0_17, %c0_18], %22 {strides = array<i32>} : memref<16x128xf32, #tpu.memory_space<vmem>>, vector<16x128xf32>,
    return
  }
  func.func @transform_0(%arg0: i32) -> (i32, i32) {
    %c0_i32 = arith.constant 0 : i32
    %c0_i32_0 = arith.constant 0 : i32
    return %arg0, %c0_i32 : i32, i32
  }
  func.func @transform_1(%arg0: i32) -> (i32, i32) {
    %c0_i32 = arith.constant 0 : i32
    %c0_i32_0 = arith.constant 0 : i32
    %c0_i32_1 = arith.constant 0 : i32
    return %c0_i32, %c0_i32_0 : i32, i32
  }
  func.func @transform_2(%arg0: i32) -> (i32, i32) {
    %c0_i32 = arith.constant 0 : i32
    %c0_i32_0 = arith.constant 0 : i32
    %c0_i32_1 = arith.constant 0 : i32
    return %c0_i32, %c0_i32_0 : i32, i32
  }
  func.func @transform_3(%arg0: i32) -> (i32, i32) {
    %c0_i32 = arith.constant 0 : i32
    %c0_i32_0 = arith.constant 0 : i32
    %c0_i32_1 = arith.constant 0 : i32
    return %c0_i32, %c0_i32_0 : i32, i32
  }
  func.func @transform_4(%arg0: i32) -> (i32, i32) {
    %c0_i32 = arith.constant 0 : i32
    %c0_i32_0 = arith.constant 0 : i32
    %c0_i32_1 = arith.constant 0 : i32
    return %c0_i32, %c0_i32_0 : i32, i32
  }
  func.func @transform_5(%arg0: i32) -> (i32, i32) {
    %c0_i32 = arith.constant 0 : i32
    %c0_i32_0 = arith.constant 0 : i32
    %c0_i32_1 = arith.constant 0 : i32
    return %c0_i32, %c0_i32_0 : i32, i32
  }
  func.func @transform_6(%arg0: i32) -> (i32, i32) {
    %c0_i32 = arith.constant 0 : i32
    %c0_i32_0 = arith.constant 0 : i32
    %c0_i32_1 = arith.constant 0 : i32
    return %c0_i32, %c0_i32_0 : i32, i32
  }
  func.func @transform_7(%arg0: i32) -> (i32, i32) {
    %c0_i32 = arith.constant 0 : i32
    %c0_i32_0 = arith.constant 0 : i32
    return %arg0, %c0_i32 : i32, i32
  }
}

</mosaic_0001>

<llo_original>
// kernel: _lambda_.1
$region0: #{_lambda_.1}
  #allocation0 [shape = 'u32[]', space=smem, size = 0x4, offset = 0x4, fixed_abs, tag = 'smem constant byte address 0x4 - core index']
  #allocation1 [shape = 'u32[144,128]{1,0:T(1,128)}', space=vmem, size = 0x12000, scoped, tag = 'internal scratch']
  %s0 = inlined_call_operand.vmem [shape: f32[16,784], index: 0, kind: input, shape index: {}]
  %s1 = inlined_call_operand.hbm [shape: bf16[784,512], index: 1, kind: input, shape index: {}]
  %s2 = inlined_call_operand.vmem [shape: f32[1,512], index: 2, kind: input, shape index: {}]
  %s3 = inlined_call_operand.vmem [shape: bf16[512,256], index: 3, kind: input, shape index: {}]
  %s4 = inlined_call_operand.vmem [shape: f32[1,256], index: 4, kind: input, shape index: {}]
  %s5 = inlined_call_operand.vmem [shape: bf16[256,128], index: 5, kind: input, shape index: {}]
  %s6 = inlined_call_operand.vmem [shape: f32[1,128], index: 6, kind: input, shape index: {}]
  %s7 = inlined_call_operand.vmem [shape: f32[16,128], index: 7, kind: output, shape index: {}]
  %s8 = sld [smem:[#allocation0]]
  $region42: #{_lambda_.1} parent=0
    _
  %s10 = ssub.s32 1, %s8
  %s11 = scalar_select 0, %s10, %s8
  $region1: #{_lambda_.1} parent=0
    #allocation2 [shape = 'u8[802816]{0}', space=vmem, size = 0xc4000, scoped, tag = 'input window, operand 1, single buffered']
    #allocation3 [shape = 's32[1]{0}', space=sflag, size = 0x4, scoped, tag = 'scoped memory for _lambda_.1']
    %12 = vsyncpa [#allocation3], 0
    // Predicated region
    $region2: #{_lambda_.1} parent=1 // pred_check
      _
    $region3: #{_lambda_.1} parent=1 // pred_check_branch
      %14 = sbr.rel (0) target = $region5
    $region4: #{_lambda_.1} parent=1 // pred_region
      _
    $region5: #{_lambda_.1} parent=1 // pred_fallthru
      _
    // Predicated region
    $region6: #{_lambda_.1} parent=1 // pred_check
      _
    $region7: #{_lambda_.1} parent=1 // pred_check_branch
      %16 = sbr.rel (0) target = $region9
    $region8: #{_lambda_.1} parent=1 // pred_region
      %s18 = ssub.s32 25088, 25088
      %19 = vsyncadd [#allocation3], %s18
      %s20 = sshll.u32 [#allocation2], 4
      %s21 = int_to_ptr.vmem [resolvable:$true] %s20
      %26 = dma.hbm_to_vmem [thread:$0]  %s1, 25088, %s21, [#allocation3], 256, 256, 16
    $region9: #{_lambda_.1} parent=1 // pred_fallthru
      _
    // Predicated region
    $region10: #{_lambda_.1} parent=1 // pred_check
      _
    $region11: #{_lambda_.1} parent=1 // pred_check_branch
      %28 = sbr.rel (0) target = $region13
    $region12: #{_lambda_.1} parent=1 // pred_region
      _
    $region13: #{_lambda_.1} parent=1 // pred_fallthru
      _
    // Predicated region
    $region14: #{_lambda_.1} parent=1 // pred_check
      _
    $region15: #{_lambda_.1} parent=1 // pred_check_branch
      %30 = sbr.rel (0) target = $region17
    $region16: #{_lambda_.1} parent=1 // pred_region
      _
    $region17: #{_lambda_.1} parent=1 // pred_fallthru
      _
    // Predicated region
    $region18: #{_lambda_.1} parent=1 // pred_check
      _
    $region19: #{_lambda_.1} parent=1 // pred_check_branch
      %32 = sbr.rel (0) target = $region21
    $region20: #{_lambda_.1} parent=1 // pred_region
      _
    $region21: #{_lambda_.1} parent=1 // pred_fallthru
      _
    // Predicated region
    $region22: #{_lambda_.1} parent=1 // pred_check
      _
    $region23: #{_lambda_.1} parent=1 // pred_check_branch
      %34 = sbr.rel (0) target = $region25
    $region24: #{_lambda_.1} parent=1 // pred_region
      _
    $region25: #{_lambda_.1} parent=1 // pred_fallthru
      _
    // Predicated region
    $region26: #{_lambda_.1} parent=1 // pred_check
      _
    $region27: #{_lambda_.1} parent=1 // pred_check_branch
      %36 = sbr.rel (0) target = $region29
    $region28: #{_lambda_.1} parent=1 // pred_region
      _
    $region29: #{_lambda_.1} parent=1 // pred_fallthru
      _
    // Predicated region
    $region30: #{_lambda_.1} parent=1 // pred_check
      _
    $region31: #{_lambda_.1} parent=1 // pred_check_branch
      %38 = sbr.rel (0) target = $region33
    $region32: #{_lambda_.1} parent=1 // pred_region
      %39 = dma.done [#allocation3], 25088
    $region33: #{_lambda_.1} parent=1 // pred_fallthru
      _
    %v41 = vld [vmem:[%s0] sm:$0xff]
    %v42 = vld [vmem:[%s0 + $0x8] sm:$0xff]
    %v43 = vld [vmem:[%s0 + $0x10] sm:$0xff]
    %v44 = vld [vmem:[%s0 + $0x18] sm:$0xff]
    %v45 = vld [vmem:[%s0 + $0x20] sm:$0xff]
    %v46 = vld [vmem:[%s0 + $0x28] sm:$0xff]
    %v47 = vld [vmem:[%s0 + $0x30] sm:$0xff]
    %v48 = vld [vmem:[%s0 + $0x38] sm:$0xff]
    %v49 = vld [vmem:[%s0 + $0x40] sm:$0xff]
    %v50 = vld [vmem:[%s0 + $0x48] sm:$0xff]
    %v51 = vld [vmem:[%s0 + $0x50] sm:$0xff]
    %v52 = vld [vmem:[%s0 + $0x58] sm:$0xff]
    %v53 = vld [vmem:[%s0 + $0x60] sm:$0xff]
    %v54 = vld [vmem:[%s0 + $0x68] sm:$0xff]
    %v55 = vpack.c.bf16 %v48, %v41
    %v56 = vpack.c.bf16 %v49, %v42
    %v57 = vpack.c.bf16 %v50, %v43
    %v58 = vpack.c.bf16 %v51, %v44
    %v59 = vpack.c.bf16 %v52, %v45
    %v60 = vpack.c.bf16 %v53, %v46
    %v61 = vpack.c.bf16 %v54, %v47
    %v62 = vld [vmem:[#allocation2] sm:$0xff]
    %v63 = vld [vmem:[#allocation2 + $0x8] sm:$0xff]
    %v64 = vld [vmem:[#allocation2 + $0x10] sm:$0xff]
    %v65 = vld [vmem:[#allocation2 + $0x18] sm:$0xff]
    %v66 = vld [vmem:[#allocation2 + $0x20] sm:$0xff]
    %v67 = vld [vmem:[#allocation2 + $0x28] sm:$0xff]
    %v68 = vld [vmem:[#allocation2 + $0x30] sm:$0xff]
    %v69 = vld [vmem:[#allocation2 + $0x38] sm:$0xff]
    %v70 = vld [vmem:[#allocation2 + $0x40] sm:$0xff]
    %v71 = vld [vmem:[#allocation2 + $0x48] sm:$0xff]
    %v72 = vld [vmem:[#allocation2 + $0x50] sm:$0xff]
    %v73 = vld [vmem:[#allocation2 + $0x58] sm:$0xff]
    %v74 = vld [vmem:[#allocation2 + $0x60] sm:$0xff]
    %v75 = vld [vmem:[#allocation2 + $0x68] sm:$0xff]
    %v76 = vld [vmem:[#allocation2 + $0x70] sm:$0xff]
    %v77 = vld [vmem:[#allocation2 + $0x78] sm:$0xff]
    %v78 = vld [vmem:[#allocation2 + $0x80] sm:$0xff]
    %v79 = vld [vmem:[#allocation2 + $0x88] sm:$0xff]
    %v80 = vld [vmem:[#allocation2 + $0x90] sm:$0xff]
    %v81 = vld [vmem:[#allocation2 + $0x98] sm:$0xff]
    %v82 = vld [vmem:[#allocation2 + $0xa0] sm:$0xff]
    %v83 = vld [vmem:[#allocation2 + $0xa8] sm:$0xff]
    %v84 = vld [vmem:[#allocation2 + $0xb0] sm:$0xff]
    %v85 = vld [vmem:[#allocation2 + $0xb8] sm:$0xff]
    %v86 = vld [vmem:[#allocation2 + $0xc0] sm:$0xff]
    %v87 = vld [vmem:[#allocation2 + $0xc8] sm:$0xff]
    %v88 = vld [vmem:[#allocation2 + $0xd0] sm:$0xff]
    %v89 = vld [vmem:[#allocation2 + $0xd8] sm:$0xff]
    %v90 = vld [vmem:[#allocation2 + $0xe0] sm:$0xff]
    %v91 = vld [vmem:[#allocation2 + $0xe8] sm:$0xff]
    %v92 = vld [vmem:[#allocation2 + $0xf0] sm:$0xff]
    %v93 = vld [vmem:[#allocation2 + $0xf8] sm:$0xff]
    %v94 = vld [vmem:[#allocation2 + $0x100] sm:$0xff]
    %v95 = vld [vmem:[#allocation2 + $0x108] sm:$0xff]
    %v96 = vld [vmem:[#allocation2 + $0x110] sm:$0xff]
    %v97 = vld [vmem:[#allocation2 + $0x118] sm:$0xff]
    %v98 = vld [vmem:[#allocation2 + $0x120] sm:$0xff]
    %v99 = vld [vmem:[#allocation2 + $0x128] sm:$0xff]
    %v100 = vld [vmem:[#allocation2 + $0x130] sm:$0xff]
    %v101 = vld [vmem:[#allocation2 + $0x138] sm:$0xff]
    %v102 = vld [vmem:[#allocation2 + $0x140] sm:$0xff]
    %v103 = vld [vmem:[#allocation2 + $0x148] sm:$0xff]
    %v104 = vld [vmem:[#allocation2 + $0x150] sm:$0xff]
    %v105 = vld [vmem:[#allocation2 + $0x158] sm:$0xff]
    %v106 = vld [vmem:[#allocation2 + $0x160] sm:$0xff]
    %v107 = vld [vmem:[#allocation2 + $0x168] sm:$0xff]
    %v108 = vld [vmem:[#allocation2 + $0x170] sm:$0xff]
    %v109 = vld [vmem:[#allocation2 + $0x178] sm:$0xff]
    %v110 = vld [vmem:[#allocation2 + $0x180] sm:$0xff]
    %v111 = vld [vmem:[#allocation2 + $0x188] sm:$0xff]
    %v112 = vld [vmem:[#allocation2 + $0x190] sm:$0xff]
    %v113 = vld [vmem:[#allocation2 + $0x198] sm:$0xff]
    %v114 = vld [vmem:[#allocation2 + $0x1a0] sm:$0xff]
    %v115 = vld [vmem:[#allocation2 + $0x1a8] sm:$0xff]
    %v116 = vld [vmem:[#allocation2 + $0x1b0] sm:$0xff]
    %v117 = vld [vmem:[#allocation2 + $0x1b8] sm:$0xff]
    %v118 = vld [vmem:[#allocation2 + $0x1c0] sm:$0xff]
    %v119 = vld [vmem:[#allocation2 + $0x1c8] sm:$0xff]
    %v120 = vld [vmem:[#allocation2 + $0x1d0] sm:$0xff]
    %v121 = vld [vmem:[#allocation2 + $0x1d8] sm:$0xff]
    %v122 = vld [vmem:[#allocation2 + $0x1e0] sm:$0xff]
    %v123 = vld [vmem:[#allocation2 + $0x1e8] sm:$0xff]
    %v124 = vld [vmem:[#allocation2 + $0x1f0] sm:$0xff]
    %v125 = vld [vmem:[#allocation2 + $0x1f8] sm:$0xff]
    %v126 = vld [vmem:[#allocation2 + $0x200] sm:$0xff]
    %v127 = vld [vmem:[#allocation2 + $0x208] sm:$0xff]
    %v128 = vld [vmem:[#allocation2 + $0x210] sm:$0xff]
    %v129 = vld [vmem:[#allocation2 + $0x218] sm:$0xff]
    %v130 = vld [vmem:[#allocation2 + $0x220] sm:$0xff]
    %v131 = vld [vmem:[#allocation2 + $0x228] sm:$0xff]
    %v132 = vld [vmem:[#allocation2 + $0x230] sm:$0xff]
    %v133 = vld [vmem:[#allocation2 + $0x238] sm:$0xff]
    %v134 = vld [vmem:[#allocation2 + $0x240] sm:$0xff]
    %v135 = vld [vmem:[#allocation2 + $0x248] sm:$0xff]
    %v136 = vld [vmem:[#allocation2 + $0x250] sm:$0xff]
    %v137 = vld [vmem:[#allocation2 + $0x258] sm:$0xff]
    %v138 = vld [vmem:[#allocation2 + $0x260] sm:$0xff]
    %v139 = vld [vmem:[#allocation2 + $0x268] sm:$0xff]
    %v140 = vld [vmem:[#allocation2 + $0x270] sm:$0xff]
    %v141 = vld [vmem:[#allocation2 + $0x278] sm:$0xff]
    %v142 = vld [vmem:[#allocation2 + $0x280] sm:$0xff]
    %v143 = vld [vmem:[#allocation2 + $0x288] sm:$0xff]
    %v144 = vld [vmem:[#allocation2 + $0x290] sm:$0xff]
    %v145 = vld [vmem:[#allocation2 + $0x298] sm:$0xff]
    %v146 = vld [vmem:[#allocation2 + $0x2a0] sm:$0xff]
    %v147 = vld [vmem:[#allocation2 + $0x2a8] sm:$0xff]
    %v148 = vld [vmem:[#allocation2 + $0x2b0] sm:$0xff]
    %v149 = vld [vmem:[#allocation2 + $0x2b8] sm:$0xff]
    %v150 = vld [vmem:[#allocation2 + $0x2c0] sm:$0xff]
    %v151 = vld [vmem:[#allocation2 + $0x2c8] sm:$0xff]
    %v152 = vld [vmem:[#allocation2 + $0x2d0] sm:$0xff]
    %v153 = vld [vmem:[#allocation2 + $0x2d8] sm:$0xff]
    %v154 = vld [vmem:[#allocation2 + $0x2e0] sm:$0xff]
    %v155 = vld [vmem:[#allocation2 + $0x2e8] sm:$0xff]
    %v156 = vld [vmem:[#allocation2 + $0x2f0] sm:$0xff]
    %v157 = vld [vmem:[#allocation2 + $0x2f8] sm:$0xff]
    %v158 = vld [vmem:[#allocation2 + $0x300] sm:$0xff]
    %v159 = vld [vmem:[#allocation2 + $0x308] sm:$0xff]
    %v160 = vld [vmem:[#allocation2 + $0x310] sm:$0xff]
    %v161 = vld [vmem:[#allocation2 + $0x318] sm:$0xff]
    %v162 = vld [vmem:[#allocation2 + $0x320] sm:$0xff]
    %v163 = vld [vmem:[#allocation2 + $0x328] sm:$0xff]
    %v164 = vld [vmem:[#allocation2 + $0x330] sm:$0xff]
    %v165 = vld [vmem:[#allocation2 + $0x338] sm:$0xff]
    %v166 = vld [vmem:[#allocation2 + $0x340] sm:$0xff]
    %v167 = vld [vmem:[#allocation2 + $0x348] sm:$0xff]
    %v168 = vld [vmem:[#allocation2 + $0x350] sm:$0xff]
    %v169 = vld [vmem:[#allocation2 + $0x358] sm:$0xff]
    %v170 = vld [vmem:[#allocation2 + $0x360] sm:$0xff]
    %v171 = vld [vmem:[#allocation2 + $0x368] sm:$0xff]
    %v172 = vld [vmem:[#allocation2 + $0x370] sm:$0xff]
    %v173 = vld [vmem:[#allocation2 + $0x378] sm:$0xff]
    %v174 = vld [vmem:[#allocation2 + $0x380] sm:$0xff]
    %v175 = vld [vmem:[#allocation2 + $0x388] sm:$0xff]
    %v176 = vld [vmem:[#allocation2 + $0x390] sm:$0xff]
    %v177 = vld [vmem:[#allocation2 + $0x398] sm:$0xff]
    %v178 = vld [vmem:[#allocation2 + $0x3a0] sm:$0xff]
    %v179 = vld [vmem:[#allocation2 + $0x3a8] sm:$0xff]
    %v180 = vld [vmem:[#allocation2 + $0x3b0] sm:$0xff]
    %v181 = vld [vmem:[#allocation2 + $0x3b8] sm:$0xff]
    %v182 = vld [vmem:[#allocation2 + $0x3c0] sm:$0xff]
    %v183 = vld [vmem:[#allocation2 + $0x3c8] sm:$0xff]
    %v184 = vld [vmem:[#allocation2 + $0x3d0] sm:$0xff]
    %v185 = vld [vmem:[#allocation2 + $0x3d8] sm:$0xff]
    %v186 = vld [vmem:[#allocation2 + $0x3e0] sm:$0xff]
    %v187 = vld [vmem:[#allocation2 + $0x3e8] sm:$0xff]
    %v188 = vld [vmem:[#allocation2 + $0x3f0] sm:$0xff]
    %v189 = vld [vmem:[#allocation2 + $0x3f8] sm:$0xff]
    %v190 = vld [vmem:[#allocation2 + $0x400] sm:$0xff]
    %v191 = vld [vmem:[#allocation2 + $0x408] sm:$0xff]
    %v192 = vld [vmem:[#allocation2 + $0x410] sm:$0xff]
    %v193 = vld [vmem:[#allocation2 + $0x418] sm:$0xff]
    %v194 = vld [vmem:[#allocation2 + $0x420] sm:$0xff]
    %v195 = vld [vmem:[#allocation2 + $0x428] sm:$0xff]
    %v196 = vld [vmem:[#allocation2 + $0x430] sm:$0xff]
    %v197 = vld [vmem:[#allocation2 + $0x438] sm:$0xff]
    %v198 = vld [vmem:[#allocation2 + $0x440] sm:$0xff]
    %v199 = vld [vmem:[#allocation2 + $0x448] sm:$0xff]
    %v200 = vld [vmem:[#allocation2 + $0x450] sm:$0xff]
    %v201 = vld [vmem:[#allocation2 + $0x458] sm:$0xff]
    %v202 = vld [vmem:[#allocation2 + $0x460] sm:$0xff]
    %v203 = vld [vmem:[#allocation2 + $0x468] sm:$0xff]
    %v204 = vld [vmem:[#allocation2 + $0x470] sm:$0xff]
    %v205 = vld [vmem:[#allocation2 + $0x478] sm:$0xff]
    %v206 = vld [vmem:[#allocation2 + $0x480] sm:$0xff]
    %v207 = vld [vmem:[#allocation2 + $0x488] sm:$0xff]
    %v208 = vld [vmem:[#allocation2 + $0x490] sm:$0xff]
    %v209 = vld [vmem:[#allocation2 + $0x498] sm:$0xff]
    %v210 = vld [vmem:[#allocation2 + $0x4a0] sm:$0xff]
    %v211 = vld [vmem:[#allocation2 + $0x4a8] sm:$0xff]
    %v212 = vld [vmem:[#allocation2 + $0x4b0] sm:$0xff]
    %v213 = vld [vmem:[#allocation2 + $0x4b8] sm:$0xff]
    %v214 = vld [vmem:[#allocation2 + $0x4c0] sm:$0xff]
    %v215 = vld [vmem:[#allocation2 + $0x4c8] sm:$0xff]
    %v216 = vld [vmem:[#allocation2 + $0x4d0] sm:$0xff]
    %v217 = vld [vmem:[#allocation2 + $0x4d8] sm:$0xff]
    %v218 = vld [vmem:[#allocation2 + $0x4e0] sm:$0xff]
    %v219 = vld [vmem:[#allocation2 + $0x4e8] sm:$0xff]
    %v220 = vld [vmem:[#allocation2 + $0x4f0] sm:$0xff]
    %v221 = vld [vmem:[#allocation2 + $0x4f8] sm:$0xff]
    %v222 = vld [vmem:[#allocation2 + $0x500] sm:$0xff]
    %v223 = vld [vmem:[#allocation2 + $0x508] sm:$0xff]
    %v224 = vld [vmem:[#allocation2 + $0x510] sm:$0xff]
    %v225 = vld [vmem:[#allocation2 + $0x518] sm:$0xff]
    %v226 = vld [vmem:[#allocation2 + $0x520] sm:$0xff]
    %v227 = vld [vmem:[#allocation2 + $0x528] sm:$0xff]
    %v228 = vld [vmem:[#allocation2 + $0x530] sm:$0xff]
    %v229 = vld [vmem:[#allocation2 + $0x538] sm:$0xff]
    %v230 = vld [vmem:[#allocation2 + $0x540] sm:$0xff]
    %v231 = vld [vmem:[#allocation2 + $0x548] sm:$0xff]
    %v232 = vld [vmem:[#allocation2 + $0x550] sm:$0xff]
    %v233 = vld [vmem:[#allocation2 + $0x558] sm:$0xff]
    %v234 = vld [vmem:[#allocation2 + $0x560] sm:$0xff]
    %v235 = vld [vmem:[#allocation2 + $0x568] sm:$0xff]
    %v236 = vld [vmem:[#allocation2 + $0x570] sm:$0xff]
    %v237 = vld [vmem:[#allocation2 + $0x578] sm:$0xff]
    %v238 = vld [vmem:[#allocation2 + $0x580] sm:$0xff]
    %v239 = vld [vmem:[#allocation2 + $0x588] sm:$0xff]
    %v240 = vld [vmem:[#allocation2 + $0x590] sm:$0xff]
    %v241 = vld [vmem:[#allocation2 + $0x598] sm:$0xff]
    %v242 = vld [vmem:[#allocation2 + $0x5a0] sm:$0xff]
    %v243 = vld [vmem:[#allocation2 + $0x5a8] sm:$0xff]
    %v244 = vld [vmem:[#allocation2 + $0x5b0] sm:$0xff]
    %v245 = vld [vmem:[#allocation2 + $0x5b8] sm:$0xff]
    %v246 = vld [vmem:[#allocation2 + $0x5c0] sm:$0xff]
    %v247 = vld [vmem:[#allocation2 + $0x5c8] sm:$0xff]
    %v248 = vld [vmem:[#allocation2 + $0x5d0] sm:$0xff]
    %v249 = vld [vmem:[#allocation2 + $0x5d8] sm:$0xff]
    %v250 = vld [vmem:[#allocation2 + $0x5e0] sm:$0xff]
    %v251 = vld [vmem:[#allocation2 + $0x5e8] sm:$0xff]
    %v252 = vld [vmem:[#allocation2 + $0x5f0] sm:$0xff]
    %v253 = vld [vmem:[#allocation2 + $0x5f8] sm:$0xff]
    %v254 = vld [vmem:[#allocation2 + $0x600] sm:$0xff]
    %v255 = vld [vmem:[#allocation2 + $0x608] sm:$0xff]
    %v256 = vld [vmem:[#allocation2 + $0x610] sm:$0xff]
    %v257 = vld [vmem:[#allocation2 + $0x618] sm:$0xff]
    %v258 = vld [vmem:[%s2] sm:$0xf]
    %v260 = vlaneseq
    %v261 = vshrl.u32 %v260, 7
    %v262 = vsub.s32 0, %v261
    %v263 = vrot.slane %v258, %v262
    %v264 = vlaneseq
    %v265 = vshrl.u32 %v264, 7
    %v266 = vsub.s32 1, %v265
    %v267 = vrot.slane %v258, %v266
    %v268 = vlaneseq
    %v269 = vshrl.u32 %v268, 7
    %v270 = vsub.s32 2, %v269
    %v271 = vrot.slane %v258, %v270
    %v272 = vlaneseq
    %v273 = vshrl.u32 %v272, 7
    %v274 = vsub.s32 3, %v273
    %v275 = vrot.slane %v258, %v274
    %v476 = vunpack.c.l.b16 %v62
    %v477 = vunpack.c.h.b16 %v62
    %v478 = vunpack.c.l.b16 %v63
    %v479 = vunpack.c.h.b16 %v63
    %v480 = vunpack.c.l.b16 %v64
    %v481 = vunpack.c.h.b16 %v64
    %v482 = vunpack.c.l.b16 %v65
    %v483 = vunpack.c.h.b16 %v65
    %v484 = vunpack.c.l.b16 %v66
    %v485 = vunpack.c.h.b16 %v66
    %v486 = vunpack.c.l.b16 %v67
    %v487 = vunpack.c.h.b16 %v67
    %v488 = vunpack.c.l.b16 %v68
    %v489 = vunpack.c.h.b16 %v68
    %v490 = vunpack.c.l.b16 %v69
    %v491 = vunpack.c.h.b16 %v69
    %v492 = vunpack.c.l.b16 %v70
    %v493 = vunpack.c.h.b16 %v70
    %v494 = vunpack.c.l.b16 %v71
    %v495 = vunpack.c.h.b16 %v71
    %v496 = vunpack.c.l.b16 %v72
    %v497 = vunpack.c.h.b16 %v72
    %v498 = vunpack.c.l.b16 %v73
    %v499 = vunpack.c.h.b16 %v73
    %v500 = vunpack.c.l.b16 %v74
    %v501 = vunpack.c.h.b16 %v74
    %v502 = vunpack.c.l.b16 %v75
    %v503 = vunpack.c.h.b16 %v75
    %v504 = vunpack.c.l.b16 %v76
    %v505 = vunpack.c.h.b16 %v76
    %v506 = vunpack.c.l.b16 %v77
    %v507 = vunpack.c.h.b16 %v77
    %v508 = vunpack.c.l.b16 %v78
    %v509 = vunpack.c.h.b16 %v78
    %v510 = vunpack.c.l.b16 %v79
    %v511 = vunpack.c.h.b16 %v79
    %v512 = vunpack.c.l.b16 %v80
    %v513 = vunpack.c.h.b16 %v80
    %v514 = vunpack.c.l.b16 %v81
    %v515 = vunpack.c.h.b16 %v81
    %v516 = vunpack.c.l.b16 %v82
    %v517 = vunpack.c.h.b16 %v82
    %v518 = vunpack.c.l.b16 %v83
    %v519 = vunpack.c.h.b16 %v83
    %v520 = vunpack.c.l.b16 %v84
    %v521 = vunpack.c.h.b16 %v84
    %v522 = vunpack.c.l.b16 %v85
    %v523 = vunpack.c.h.b16 %v85
    %v524 = vunpack.c.l.b16 %v86
    %v525 = vunpack.c.h.b16 %v86
    %v526 = vunpack.c.l.b16 %v87
    %v527 = vunpack.c.h.b16 %v87
    %v528 = vunpack.c.l.b16 %v88
    %v529 = vunpack.c.h.b16 %v88
    %v530 = vunpack.c.l.b16 %v89
    %v531 = vunpack.c.h.b16 %v89
    %v532 = vunpack.c.l.b16 %v90
    %v533 = vunpack.c.h.b16 %v90
    %v534 = vunpack.c.l.b16 %v91
    %v535 = vunpack.c.h.b16 %v91
    %v536 = vunpack.c.l.b16 %v92
    %v537 = vunpack.c.h.b16 %v92
    %v538 = vunpack.c.l.b16 %v93
    %v539 = vunpack.c.h.b16 %v93
    %v540 = vunpack.c.l.b16 %v94
    %v541 = vunpack.c.h.b16 %v94
    %v542 = vunpack.c.l.b16 %v95
    %v543 = vunpack.c.h.b16 %v95
    %v544 = vunpack.c.l.b16 %v96
    %v545 = vunpack.c.h.b16 %v96
    %v546 = vunpack.c.l.b16 %v97
    %v547 = vunpack.c.h.b16 %v97
    %v548 = vunpack.c.l.b16 %v98
    %v549 = vunpack.c.h.b16 %v98
    %v550 = vunpack.c.l.b16 %v99
    %v551 = vunpack.c.h.b16 %v99
    %v552 = vunpack.c.l.b16 %v100
    %v553 = vunpack.c.h.b16 %v100
    %v554 = vunpack.c.l.b16 %v101
    %v555 = vunpack.c.h.b16 %v101
    %v556 = vunpack.c.l.b16 %v102
    %v557 = vunpack.c.h.b16 %v102
    %v558 = vunpack.c.l.b16 %v103
    %v559 = vunpack.c.h.b16 %v103
    %v560 = vunpack.c.l.b16 %v104
    %v561 = vunpack.c.h.b16 %v104
    %v562 = vunpack.c.l.b16 %v105
    %v563 = vunpack.c.h.b16 %v105
    %v564 = vunpack.c.l.b16 %v106
    %v565 = vunpack.c.h.b16 %v106
    %v566 = vunpack.c.l.b16 %v107
    %v567 = vunpack.c.h.b16 %v107
    %v568 = vunpack.c.l.b16 %v108
    %v569 = vunpack.c.h.b16 %v108
    %v570 = vunpack.c.l.b16 %v109
    %v571 = vunpack.c.h.b16 %v109
    %v572 = vunpack.c.l.b16 %v110
    %v573 = vunpack.c.h.b16 %v110
    %v574 = vunpack.c.l.b16 %v111
    %v575 = vunpack.c.h.b16 %v111
    %v576 = vunpack.c.l.b16 %v112
    %v577 = vunpack.c.h.b16 %v112
    %v578 = vunpack.c.l.b16 %v113
    %v579 = vunpack.c.h.b16 %v113
    %v580 = vunpack.c.l.b16 %v114
    %v581 = vunpack.c.h.b16 %v114
    %v582 = vunpack.c.l.b16 %v115
    %v583 = vunpack.c.h.b16 %v115
    %v584 = vunpack.c.l.b16 %v116
    %v585 = vunpack.c.h.b16 %v116
    %v586 = vunpack.c.l.b16 %v117
    %v587 = vunpack.c.h.b16 %v117
    %v588 = vunpack.c.l.b16 %v118
    %v589 = vunpack.c.h.b16 %v118
    %v590 = vunpack.c.l.b16 %v119
    %v591 = vunpack.c.h.b16 %v119
    %v592 = vunpack.c.l.b16 %v120
    %v593 = vunpack.c.h.b16 %v120
    %v594 = vunpack.c.l.b16 %v121
    %v595 = vunpack.c.h.b16 %v121
    %v596 = vunpack.c.l.b16 %v122
    %v597 = vunpack.c.h.b16 %v122
    %v598 = vunpack.c.l.b16 %v123
    %v599 = vunpack.c.h.b16 %v123
    %v600 = vunpack.c.l.b16 %v124
    %v601 = vunpack.c.h.b16 %v124
    %v602 = vunpack.c.l.b16 %v125
    %v603 = vunpack.c.h.b16 %v125
    %v604 = vunpack.c.l.b16 %v126
    %v605 = vunpack.c.h.b16 %v126
    %v606 = vunpack.c.l.b16 %v127
    %v607 = vunpack.c.h.b16 %v127
    %v608 = vunpack.c.l.b16 %v128
    %v609 = vunpack.c.h.b16 %v128
    %v610 = vunpack.c.l.b16 %v129
    %v611 = vunpack.c.h.b16 %v129
    %v612 = vunpack.c.l.b16 %v130
    %v613 = vunpack.c.h.b16 %v130
    %v614 = vunpack.c.l.b16 %v131
    %v615 = vunpack.c.h.b16 %v131
    %v616 = vunpack.c.l.b16 %v132
    %v617 = vunpack.c.h.b16 %v132
    %v618 = vunpack.c.l.b16 %v133
    %v619 = vunpack.c.h.b16 %v133
    %v620 = vunpack.c.l.b16 %v134
    %v621 = vunpack.c.h.b16 %v134
    %v622 = vunpack.c.l.b16 %v135
    %v623 = vunpack.c.h.b16 %v135
    %v624 = vunpack.c.l.b16 %v136
    %v625 = vunpack.c.h.b16 %v136
    %v626 = vunpack.c.l.b16 %v137
    %v627 = vunpack.c.h.b16 %v137
    %v628 = vunpack.c.l.b16 %v138
    %v629 = vunpack.c.h.b16 %v138
    %v630 = vunpack.c.l.b16 %v139
    %v631 = vunpack.c.h.b16 %v139
    %v632 = vunpack.c.l.b16 %v140
    %v633 = vunpack.c.h.b16 %v140
    %v634 = vunpack.c.l.b16 %v141
    %v635 = vunpack.c.h.b16 %v141
    %v636 = vunpack.c.l.b16 %v142
    %v637 = vunpack.c.h.b16 %v142
    %v638 = vunpack.c.l.b16 %v143
    %v639 = vunpack.c.h.b16 %v143
    %v640 = vunpack.c.l.b16 %v144
    %v641 = vunpack.c.h.b16 %v144
    %v642 = vunpack.c.l.b16 %v145
    %v643 = vunpack.c.h.b16 %v145
    %v644 = vunpack.c.l.b16 %v146
    %v645 = vunpack.c.h.b16 %v146
    %v646 = vunpack.c.l.b16 %v147
    %v647 = vunpack.c.h.b16 %v147
    %v648 = vunpack.c.l.b16 %v148
    %v649 = vunpack.c.h.b16 %v148
    %v650 = vunpack.c.l.b16 %v149
    %v651 = vunpack.c.h.b16 %v149
    %v652 = vunpack.c.l.b16 %v150
    %v653 = vunpack.c.h.b16 %v150
    %v654 = vunpack.c.l.b16 %v151
    %v655 = vunpack.c.h.b16 %v151
    %v656 = vunpack.c.l.b16 %v152
    %v657 = vunpack.c.h.b16 %v152
    %v658 = vunpack.c.l.b16 %v153
    %v659 = vunpack.c.h.b16 %v153
    %v660 = vunpack.c.l.b16 %v154
    %v661 = vunpack.c.h.b16 %v154
    %v662 = vunpack.c.l.b16 %v155
    %v663 = vunpack.c.h.b16 %v155
    %v664 = vunpack.c.l.b16 %v156
    %v665 = vunpack.c.h.b16 %v156
    %v666 = vunpack.c.l.b16 %v157
    %v667 = vunpack.c.h.b16 %v157
    %v668 = vunpack.c.l.b16 %v158
    %v669 = vunpack.c.h.b16 %v158
    %v670 = vunpack.c.l.b16 %v159
    %v671 = vunpack.c.h.b16 %v159
    %v672 = vunpack.c.l.b16 %v160
    %v673 = vunpack.c.h.b16 %v160
    %v674 = vunpack.c.l.b16 %v161
    %v675 = vunpack.c.h.b16 %v161
    %v676 = vunpack.c.l.b16 %v162
    %v677 = vunpack.c.h.b16 %v162
    %v678 = vunpack.c.l.b16 %v163
    %v679 = vunpack.c.h.b16 %v163
    %v680 = vunpack.c.l.b16 %v164
    %v681 = vunpack.c.h.b16 %v164
    %v682 = vunpack.c.l.b16 %v165
    %v683 = vunpack.c.h.b16 %v165
    %v684 = vunpack.c.l.b16 %v166
    %v685 = vunpack.c.h.b16 %v166
    %v686 = vunpack.c.l.b16 %v167
    %v687 = vunpack.c.h.b16 %v167
    %v688 = vunpack.c.l.b16 %v168
    %v689 = vunpack.c.h.b16 %v168
    %v690 = vunpack.c.l.b16 %v169
    %v691 = vunpack.c.h.b16 %v169
    %v692 = vunpack.c.l.b16 %v170
    %v693 = vunpack.c.h.b16 %v170
    %v694 = vunpack.c.l.b16 %v171
    %v695 = vunpack.c.h.b16 %v171
    %v696 = vunpack.c.l.b16 %v172
    %v697 = vunpack.c.h.b16 %v172
    %v698 = vunpack.c.l.b16 %v173
    %v699 = vunpack.c.h.b16 %v173
    %v700 = vunpack.c.l.b16 %v174
    %v701 = vunpack.c.h.b16 %v174
    %v702 = vunpack.c.l.b16 %v175
    %v703 = vunpack.c.h.b16 %v175
    %v704 = vunpack.c.l.b16 %v176
    %v705 = vunpack.c.h.b16 %v176
    %v706 = vunpack.c.l.b16 %v177
    %v707 = vunpack.c.h.b16 %v177
    %v708 = vunpack.c.l.b16 %v178
    %v709 = vunpack.c.h.b16 %v178
    %v710 = vunpack.c.l.b16 %v179
    %v711 = vunpack.c.h.b16 %v179
    %v712 = vunpack.c.l.b16 %v180
    %v713 = vunpack.c.h.b16 %v180
    %v714 = vunpack.c.l.b16 %v181
    %v715 = vunpack.c.h.b16 %v181
    %v716 = vunpack.c.l.b16 %v182
    %v717 = vunpack.c.h.b16 %v182
    %v718 = vunpack.c.l.b16 %v183
    %v719 = vunpack.c.h.b16 %v183
    %v720 = vunpack.c.l.b16 %v184
    %v721 = vunpack.c.h.b16 %v184
    %v722 = vunpack.c.l.b16 %v185
    %v723 = vunpack.c.h.b16 %v185
    %v724 = vunpack.c.l.b16 %v186
    %v725 = vunpack.c.h.b16 %v186
    %v726 = vunpack.c.l.b16 %v187
    %v727 = vunpack.c.h.b16 %v187
    %v728 = vunpack.c.l.b16 %v188
    %v729 = vunpack.c.h.b16 %v188
    %v730 = vunpack.c.l.b16 %v189
    %v731 = vunpack.c.h.b16 %v189
    %v732 = vunpack.c.l.b16 %v190
    %v733 = vunpack.c.h.b16 %v190
    %v734 = vunpack.c.l.b16 %v191
    %v735 = vunpack.c.h.b16 %v191
    %v736 = vunpack.c.l.b16 %v192
    %v737 = vunpack.c.h.b16 %v192
    %v738 = vunpack.c.l.b16 %v193
    %v739 = vunpack.c.h.b16 %v193
    %v740 = vunpack.c.l.b16 %v194
    %v741 = vunpack.c.h.b16 %v194
    %v742 = vunpack.c.l.b16 %v195
    %v743 = vunpack.c.h.b16 %v195
    %v744 = vunpack.c.l.b16 %v196
    %v745 = vunpack.c.h.b16 %v196
    %v746 = vunpack.c.l.b16 %v197
    %v747 = vunpack.c.h.b16 %v197
    %v748 = vunpack.c.l.b16 %v198
    %v749 = vunpack.c.h.b16 %v198
    %v750 = vunpack.c.l.b16 %v199
    %v751 = vunpack.c.h.b16 %v199
    %v752 = vunpack.c.l.b16 %v200
    %v753 = vunpack.c.h.b16 %v200
    %v754 = vunpack.c.l.b16 %v201
    %v755 = vunpack.c.h.b16 %v201
    %v756 = vunpack.c.l.b16 %v202
    %v757 = vunpack.c.h.b16 %v202
    %v758 = vunpack.c.l.b16 %v203
    %v759 = vunpack.c.h.b16 %v203
    %v760 = vunpack.c.l.b16 %v204
    %v761 = vunpack.c.h.b16 %v204
    %v762 = vunpack.c.l.b16 %v205
    %v763 = vunpack.c.h.b16 %v205
    %v764 = vunpack.c.l.b16 %v206
    %v765 = vunpack.c.h.b16 %v206
    %v766 = vunpack.c.l.b16 %v207
    %v767 = vunpack.c.h.b16 %v207
    %v768 = vunpack.c.l.b16 %v208
    %v769 = vunpack.c.h.b16 %v208
    %v770 = vunpack.c.l.b16 %v209
    %v771 = vunpack.c.h.b16 %v209
    %v772 = vunpack.c.l.b16 %v210
    %v773 = vunpack.c.h.b16 %v210
    %v774 = vunpack.c.l.b16 %v211
    %v775 = vunpack.c.h.b16 %v211
    %v776 = vunpack.c.l.b16 %v212
    %v777 = vunpack.c.h.b16 %v212
    %v778 = vunpack.c.l.b16 %v213
    %v779 = vunpack.c.h.b16 %v213
    %v780 = vunpack.c.l.b16 %v214
    %v781 = vunpack.c.h.b16 %v214
    %v782 = vunpack.c.l.b16 %v215
    %v783 = vunpack.c.h.b16 %v215
    %v784 = vunpack.c.l.b16 %v216
    %v785 = vunpack.c.h.b16 %v216
    %v786 = vunpack.c.l.b16 %v217
    %v787 = vunpack.c.h.b16 %v217
    %v788 = vunpack.c.l.b16 %v218
    %v789 = vunpack.c.h.b16 %v218
    %v790 = vunpack.c.l.b16 %v219
    %v791 = vunpack.c.h.b16 %v219
    %v792 = vunpack.c.l.b16 %v220
    %v793 = vunpack.c.h.b16 %v220
    %v794 = vunpack.c.l.b16 %v221
    %v795 = vunpack.c.h.b16 %v221
    %v796 = vunpack.c.l.b16 %v222
    %v797 = vunpack.c.h.b16 %v222
    %v798 = vunpack.c.l.b16 %v223
    %v799 = vunpack.c.h.b16 %v223
    %v800 = vunpack.c.l.b16 %v224
    %v801 = vunpack.c.h.b16 %v224
    %v802 = vunpack.c.l.b16 %v225
    %v803 = vunpack.c.h.b16 %v225
    %v804 = vunpack.c.l.b16 %v226
    %v805 = vunpack.c.h.b16 %v226
    %v806 = vunpack.c.l.b16 %v227
    %v807 = vunpack.c.h.b16 %v227
    %v808 = vunpack.c.l.b16 %v228
    %v809 = vunpack.c.h.b16 %v228
    %v810 = vunpack.c.l.b16 %v229
    %v811 = vunpack.c.h.b16 %v229
    %v812 = vunpack.c.l.b16 %v230
    %v813 = vunpack.c.h.b16 %v230
    %v814 = vunpack.c.l.b16 %v231
    %v815 = vunpack.c.h.b16 %v231
    %v816 = vunpack.c.l.b16 %v232
    %v817 = vunpack.c.h.b16 %v232
    %v818 = vunpack.c.l.b16 %v233
    %v819 = vunpack.c.h.b16 %v233
    %v820 = vunpack.c.l.b16 %v234
    %v821 = vunpack.c.h.b16 %v234
    %v822 = vunpack.c.l.b16 %v235
    %v823 = vunpack.c.h.b16 %v235
    %v824 = vunpack.c.l.b16 %v236
    %v825 = vunpack.c.h.b16 %v236
    %v826 = vunpack.c.l.b16 %v237
    %v827 = vunpack.c.h.b16 %v237
    %v828 = vunpack.c.l.b16 %v238
    %v829 = vunpack.c.h.b16 %v238
    %v830 = vunpack.c.l.b16 %v239
    %v831 = vunpack.c.h.b16 %v239
    %v832 = vunpack.c.l.b16 %v240
    %v833 = vunpack.c.h.b16 %v240
    %v834 = vunpack.c.l.b16 %v241
    %v835 = vunpack.c.h.b16 %v241
    %v836 = vunpack.c.l.b16 %v242
    %v837 = vunpack.c.h.b16 %v242
    %v838 = vunpack.c.l.b16 %v243
    %v839 = vunpack.c.h.b16 %v243
    %v840 = vunpack.c.l.b16 %v244
    %v841 = vunpack.c.h.b16 %v244
    %v842 = vunpack.c.l.b16 %v245
    %v843 = vunpack.c.h.b16 %v245
    %v844 = vunpack.c.l.b16 %v246
    %v845 = vunpack.c.h.b16 %v246
    %v846 = vunpack.c.l.b16 %v247
    %v847 = vunpack.c.h.b16 %v247
    %v848 = vunpack.c.l.b16 %v248
    %v849 = vunpack.c.h.b16 %v248
    %v850 = vunpack.c.l.b16 %v249
    %v851 = vunpack.c.h.b16 %v249
    %v852 = vunpack.c.l.b16 %v250
    %v853 = vunpack.c.h.b16 %v250
    %v854 = vunpack.c.l.b16 %v251
    %v855 = vunpack.c.h.b16 %v251
    %v856 = vunpack.c.l.b16 %v252
    %v857 = vunpack.c.h.b16 %v252
    %v858 = vunpack.c.l.b16 %v253
    %v859 = vunpack.c.h.b16 %v253
    %v860 = vunpack.c.l.b16 %v254
    %v861 = vunpack.c.h.b16 %v254
    %v862 = vunpack.c.l.b16 %v255
    %v863 = vunpack.c.h.b16 %v255
    %v864 = vunpack.c.l.b16 %v256
    %v865 = vunpack.c.h.b16 %v256
    %v866 = vunpack.c.l.b16 %v257
    %v867 = vunpack.c.h.b16 %v257
    %v868 = vpack.c.b16 %v480, %v476
    %v869 = vpack.c.b16 %v481, %v477
    %v870 = vpack.c.b16 %v482, %v478
    %v871 = vpack.c.b16 %v483, %v479
    %v872 = vpack.c.b16 %v488, %v484
    %v873 = vpack.c.b16 %v489, %v485
    %v874 = vpack.c.b16 %v490, %v486
    %v875 = vpack.c.b16 %v491, %v487
    %v876 = vpack.c.b16 %v496, %v492
    %v877 = vpack.c.b16 %v497, %v493
    %v878 = vpack.c.b16 %v498, %v494
    %v879 = vpack.c.b16 %v499, %v495
    %v880 = vpack.c.b16 %v504, %v500
    %v881 = vpack.c.b16 %v505, %v501
    %v882 = vpack.c.b16 %v506, %v502
    %v883 = vpack.c.b16 %v507, %v503
    %v884 = vpack.c.b16 %v512, %v508
    %v885 = vpack.c.b16 %v513, %v509
    %v886 = vpack.c.b16 %v514, %v510
    %v887 = vpack.c.b16 %v515, %v511
    %v888 = vpack.c.b16 %v520, %v516
    %v889 = vpack.c.b16 %v521, %v517
    %v890 = vpack.c.b16 %v522, %v518
    %v891 = vpack.c.b16 %v523, %v519
    %v892 = vpack.c.b16 %v528, %v524
    %v893 = vpack.c.b16 %v529, %v525
    %v894 = vpack.c.b16 %v530, %v526
    %v895 = vpack.c.b16 %v531, %v527
    %v896 = vpack.c.b16 %v536, %v532
    %v897 = vpack.c.b16 %v537, %v533
    %v898 = vpack.c.b16 %v538, %v534
    %v899 = vpack.c.b16 %v539, %v535
    %v900 = vpack.c.b16 %v544, %v540
    %v901 = vpack.c.b16 %v545, %v541
    %v902 = vpack.c.b16 %v546, %v542
    %v903 = vpack.c.b16 %v547, %v543
    %v904 = vpack.c.b16 %v552, %v548
    %v905 = vpack.c.b16 %v553, %v549
    %v906 = vpack.c.b16 %v554, %v550
    %v907 = vpack.c.b16 %v555, %v551
    %v908 = vpack.c.b16 %v560, %v556
    %v909 = vpack.c.b16 %v561, %v557
    %v910 = vpack.c.b16 %v562, %v558
    %v911 = vpack.c.b16 %v563, %v559
    %v912 = vpack.c.b16 %v568, %v564
    %v913 = vpack.c.b16 %v569, %v565
    %v914 = vpack.c.b16 %v570, %v566
    %v915 = vpack.c.b16 %v571, %v567
    %v916 = vpack.c.b16 %v576, %v572
    %v917 = vpack.c.b16 %v577, %v573
    %v918 = vpack.c.b16 %v578, %v574
    %v919 = vpack.c.b16 %v579, %v575
    %v920 = vpack.c.b16 %v584, %v580
    %v921 = vpack.c.b16 %v585, %v581
    %v922 = vpack.c.b16 %v586, %v582
    %v923 = vpack.c.b16 %v587, %v583
    %v924 = vpack.c.b16 %v592, %v588
    %v925 = vpack.c.b16 %v593, %v589
    %v926 = vpack.c.b16 %v594, %v590
    %v927 = vpack.c.b16 %v595, %v591
    %v928 = vpack.c.b16 %v600, %v596
    %v929 = vpack.c.b16 %v601, %v597
    %v930 = vpack.c.b16 %v602, %v598
    %v931 = vpack.c.b16 %v603, %v599
    %v932 = vpack.c.b16 %v608, %v604
    %v933 = vpack.c.b16 %v609, %v605
    %v934 = vpack.c.b16 %v610, %v606
    %v935 = vpack.c.b16 %v611, %v607
    %v936 = vpack.c.b16 %v616, %v612
    %v937 = vpack.c.b16 %v617, %v613
    %v938 = vpack.c.b16 %v618, %v614
    %v939 = vpack.c.b16 %v619, %v615
    %v940 = vpack.c.b16 %v624, %v620
    %v941 = vpack.c.b16 %v625, %v621
    %v942 = vpack.c.b16 %v626, %v622
    %v943 = vpack.c.b16 %v627, %v623
    %v944 = vpack.c.b16 %v632, %v628
    %v945 = vpack.c.b16 %v633, %v629
    %v946 = vpack.c.b16 %v634, %v630
    %v947 = vpack.c.b16 %v635, %v631
    %v948 = vpack.c.b16 %v640, %v636
    %v949 = vpack.c.b16 %v641, %v637
    %v950 = vpack.c.b16 %v642, %v638
    %v951 = vpack.c.b16 %v643, %v639
    %v952 = vpack.c.b16 %v648, %v644
    %v953 = vpack.c.b16 %v649, %v645
    %v954 = vpack.c.b16 %v650, %v646
    %v955 = vpack.c.b16 %v651, %v647
    %v956 = vpack.c.b16 %v656, %v652
    %v957 = vpack.c.b16 %v657, %v653
    %v958 = vpack.c.b16 %v658, %v654
    %v959 = vpack.c.b16 %v659, %v655
    %v960 = vpack.c.b16 %v664, %v660
    %v961 = vpack.c.b16 %v665, %v661
    %v962 = vpack.c.b16 %v666, %v662
    %v963 = vpack.c.b16 %v667, %v663
    %v964 = vpack.c.b16 %v672, %v668
    %v965 = vpack.c.b16 %v673, %v669
    %v966 = vpack.c.b16 %v674, %v670
    %v967 = vpack.c.b16 %v675, %v671
    %v968 = vpack.c.b16 %v680, %v676
    %v969 = vpack.c.b16 %v681, %v677
    %v970 = vpack.c.b16 %v682, %v678
    %v971 = vpack.c.b16 %v683, %v679
    %v972 = vpack.c.b16 %v688, %v684
    %v973 = vpack.c.b16 %v689, %v685
    %v974 = vpack.c.b16 %v690, %v686
    %v975 = vpack.c.b16 %v691, %v687
    %v976 = vpack.c.b16 %v696, %v692
    %v977 = vpack.c.b16 %v697, %v693
    %v978 = vpack.c.b16 %v698, %v694
    %v979 = vpack.c.b16 %v699, %v695
    %v980 = vpack.c.b16 %v704, %v700
    %v981 = vpack.c.b16 %v705, %v701
    %v982 = vpack.c.b16 %v706, %v702
    %v983 = vpack.c.b16 %v707, %v703
    %v984 = vpack.c.b16 %v712, %v708
    %v985 = vpack.c.b16 %v713, %v709
    %v986 = vpack.c.b16 %v714, %v710
    %v987 = vpack.c.b16 %v715, %v711
    %v988 = vpack.c.b16 %v720, %v716
    %v989 = vpack.c.b16 %v721, %v717
    %v990 = vpack.c.b16 %v722, %v718
    %v991 = vpack.c.b16 %v723, %v719
    %v992 = vpack.c.b16 %v728, %v724
    %v993 = vpack.c.b16 %v729, %v725
    %v994 = vpack.c.b16 %v730, %v726
    %v995 = vpack.c.b16 %v731, %v727
    %v996 = vpack.c.b16 %v736, %v732
    %v997 = vpack.c.b16 %v737, %v733
    %v998 = vpack.c.b16 %v738, %v734
    %v999 = vpack.c.b16 %v739, %v735
    %v1000 = vpack.c.b16 %v744, %v740
    %v1001 = vpack.c.b16 %v745, %v741
    %v1002 = vpack.c.b16 %v746, %v742
    %v1003 = vpack.c.b16 %v747, %v743
    %v1004 = vpack.c.b16 %v752, %v748
    %v1005 = vpack.c.b16 %v753, %v749
    %v1006 = vpack.c.b16 %v754, %v750
    %v1007 = vpack.c.b16 %v755, %v751
    %v1008 = vpack.c.b16 %v760, %v756
    %v1009 = vpack.c.b16 %v761, %v757
    %v1010 = vpack.c.b16 %v762, %v758
    %v1011 = vpack.c.b16 %v763, %v759
    %v1012 = vpack.c.b16 %v768, %v764
    %v1013 = vpack.c.b16 %v769, %v765
    %v1014 = vpack.c.b16 %v770, %v766
    %v1015 = vpack.c.b16 %v771, %v767
    %v1016 = vpack.c.b16 %v776, %v772
    %v1017 = vpack.c.b16 %v777, %v773
    %v1018 = vpack.c.b16 %v778, %v774
    %v1019 = vpack.c.b16 %v779, %v775
    %v1020 = vpack.c.b16 %v784, %v780
    %v1021 = vpack.c.b16 %v785, %v781
    %v1022 = vpack.c.b16 %v786, %v782
    %v1023 = vpack.c.b16 %v787, %v783
    %v1024 = vpack.c.b16 %v792, %v788
    %v1025 = vpack.c.b16 %v793, %v789
    %v1026 = vpack.c.b16 %v794, %v790
    %v1027 = vpack.c.b16 %v795, %v791
    %v1028 = vpack.c.b16 %v800, %v796
    %v1029 = vpack.c.b16 %v801, %v797
    %v1030 = vpack.c.b16 %v802, %v798
    %v1031 = vpack.c.b16 %v803, %v799
    %v1032 = vpack.c.b16 %v808, %v804
    %v1033 = vpack.c.b16 %v809, %v805
    %v1034 = vpack.c.b16 %v810, %v806
    %v1035 = vpack.c.b16 %v811, %v807
    %v1036 = vpack.c.b16 %v816, %v812
    %v1037 = vpack.c.b16 %v817, %v813
    %v1038 = vpack.c.b16 %v818, %v814
    %v1039 = vpack.c.b16 %v819, %v815
    %v1040 = vpack.c.b16 %v824, %v820
    %v1041 = vpack.c.b16 %v825, %v821
    %v1042 = vpack.c.b16 %v826, %v822
    %v1043 = vpack.c.b16 %v827, %v823
    %v1044 = vpack.c.b16 %v832, %v828
    %v1045 = vpack.c.b16 %v833, %v829
    %v1046 = vpack.c.b16 %v834, %v830
    %v1047 = vpack.c.b16 %v835, %v831
    %v1048 = vpack.c.b16 %v840, %v836
    %v1049 = vpack.c.b16 %v841, %v837
    %v1050 = vpack.c.b16 %v842, %v838
    %v1051 = vpack.c.b16 %v843, %v839
    %v1052 = vpack.c.b16 %v848, %v844
    %v1053 = vpack.c.b16 %v849, %v845
    %v1054 = vpack.c.b16 %v850, %v846
    %v1055 = vpack.c.b16 %v851, %v847
    %v1056 = vpack.c.b16 %v856, %v852
    %v1057 = vpack.c.b16 %v857, %v853
    %v1058 = vpack.c.b16 %v858, %v854
    %v1059 = vpack.c.b16 %v859, %v855
    %v1060 = vpack.c.b16 %v864, %v860
    %v1061 = vpack.c.b16 %v865, %v861
    %v1062 = vpack.c.b16 %v866, %v862
    %v1063 = vpack.c.b16 %v867, %v863
    %vm1260 = vcmask 130048
    %v1262 = vsel %vm1260, %v61, 0
    %1264 = vmatprep.subr.bf16.mxu0 %v869
    %1265 = vmatpush1.bf16.msra.mxu0 %v868
    %1266 = vmatprep.subr.bf16.mxu0 %v873
    %1267 = vmatpush1.bf16.msra.mxu0 %v872
    %1268 = vmatprep.subr.bf16.mxu0 %v877
    %1269 = vmatpush1.bf16.msra.mxu0 %v876
    %1270 = vmatprep.subr.bf16.mxu0 %v881
    %1271 = vmatpush1.bf16.msra.mxu0 %v880
    %1272 = vmatprep.subr.bf16.mxu0 %v885
    %1273 = vmatpush1.bf16.msra.mxu0 %v884
    %1274 = vmatprep.subr.bf16.mxu0 %v889
    %1275 = vmatpush1.bf16.msra.mxu0 %v888
    %1276 = vmatprep.subr.bf16.mxu0 %v893
    %1277 = vmatpush1.bf16.msra.mxu0 %v892
    %1278 = vmatprep.subr.bf16.mxu0 %v897
    %1279 = vmatpush1.bf16.msra.mxu0 %v896
    %1280 = vmatprep.subr.bf16.mxu0 %v901
    %1281 = vmatpush1.bf16.msra.mxu0 %v900
    %1282 = vmatprep.subr.bf16.mxu0 %v905
    %1283 = vmatpush1.bf16.msra.mxu0 %v904
    %1284 = vmatprep.subr.bf16.mxu0 %v909
    %1285 = vmatpush1.bf16.msra.mxu0 %v908
    %1286 = vmatprep.subr.bf16.mxu0 %v913
    %1287 = vmatpush1.bf16.msra.mxu0 %v912
    %1288 = vmatprep.subr.bf16.mxu0 %v917
    %1289 = vmatpush1.bf16.msra.mxu0 %v916
    %1290 = vmatprep.subr.bf16.mxu0 %v921
    %1291 = vmatpush1.bf16.msra.mxu0 %v920
    %1292 = vmatprep.subr.bf16.mxu0 %v925
    %1293 = vmatpush1.bf16.msra.mxu0 %v924
    %1294 = vmatprep.subr.bf16.mxu0 %v929
    %1295 = vmatpush1.bf16.msra.mxu0 %v928
    %1296 = vmatprep.mubr.bf16.mxu0 %v56
    %1297 = vmatmul.mubr.bf16.gmra.mrb[0].mxu0 %v55
    %v1298 = vpop.f32.mrb[0].mxu0
    %v1299 = vadd.f32 %v263, %v1298
    %v1300 = vpop.f32.mrb[0].mxu0
    %v1301 = vadd.f32 %v267, %v1300
    %v1302 = vpop.f32.mrb[0].mxu0
    %v1303 = vadd.f32 %v263, %v1302
    %v1304 = vpop.f32.mrb[0].mxu0
    %v1305 = vadd.f32 %v267, %v1304
    %1306 = vdwg.mxu0
    %1307 = vmatprep.subr.bf16.mxu0 %v933
    %1308 = vmatpush1.bf16.msra.mxu0 %v932
    %1309 = vmatprep.subr.bf16.mxu0 %v937
    %1310 = vmatpush1.bf16.msra.mxu0 %v936
    %1311 = vmatprep.subr.bf16.mxu0 %v941
    %1312 = vmatpush1.bf16.msra.mxu0 %v940
    %1313 = vmatprep.subr.bf16.mxu0 %v945
    %1314 = vmatpush1.bf16.msra.mxu0 %v944
    %1315 = vmatprep.subr.bf16.mxu0 %v949
    %1316 = vmatpush1.bf16.msra.mxu0 %v948
    %1317 = vmatprep.subr.bf16.mxu0 %v953
    %1318 = vmatpush1.bf16.msra.mxu0 %v952
    %1319 = vmatprep.subr.bf16.mxu0 %v957
    %1320 = vmatpush1.bf16.msra.mxu0 %v956
    %1321 = vmatprep.subr.bf16.mxu0 %v961
    %1322 = vmatpush1.bf16.msra.mxu0 %v960
    %1323 = vmatprep.subr.bf16.mxu0 %v965
    %1324 = vmatpush1.bf16.msra.mxu0 %v964
    %1325 = vmatprep.subr.bf16.mxu0 %v969
    %1326 = vmatpush1.bf16.msra.mxu0 %v968
    %1327 = vmatprep.subr.bf16.mxu0 %v973
    %1328 = vmatpush1.bf16.msra.mxu0 %v972
    %1329 = vmatprep.subr.bf16.mxu0 %v977
    %1330 = vmatpush1.bf16.msra.mxu0 %v976
    %1331 = vmatprep.subr.bf16.mxu0 %v981
    %1332 = vmatpush1.bf16.msra.mxu0 %v980
    %1333 = vmatprep.subr.bf16.mxu0 %v985
    %1334 = vmatpush1.bf16.msra.mxu0 %v984
    %1335 = vmatprep.subr.bf16.mxu0 %v989
    %1336 = vmatpush1.bf16.msra.mxu0 %v988
    %1337 = vmatprep.subr.bf16.mxu0 %v993
    %1338 = vmatpush1.bf16.msra.mxu0 %v992
    %1339 = vmatprep.mubr.bf16.mxu0 %v58
    %1340 = vmatmul.mubr.bf16.gmra.mrb[0].mxu0 %v57
    %v1341 = vpop.f32.mrb[0].mxu0
    %v1342 = vadd.f32 %v1299, %v1341
    %v1343 = vpop.f32.mrb[0].mxu0
    %v1344 = vadd.f32 %v1301, %v1343
    %v1345 = vpop.f32.mrb[0].mxu0
    %v1346 = vadd.f32 %v1303, %v1345
    %v1347 = vpop.f32.mrb[0].mxu0
    %v1348 = vadd.f32 %v1305, %v1347
    %1349 = vdwg.mxu0
    %1350 = vmatprep.subr.bf16.mxu0 %v997
    %1351 = vmatpush1.bf16.msra.mxu0 %v996
    %1352 = vmatprep.subr.bf16.mxu0 %v1001
    %1353 = vmatpush1.bf16.msra.mxu0 %v1000
    %1354 = vmatprep.subr.bf16.mxu0 %v1005
    %1355 = vmatpush1.bf16.msra.mxu0 %v1004
    %1356 = vmatprep.subr.bf16.mxu0 %v1009
    %1357 = vmatpush1.bf16.msra.mxu0 %v1008
    %1358 = vmatprep.subr.bf16.mxu0 %v1013
    %1359 = vmatpush1.bf16.msra.mxu0 %v1012
    %1360 = vmatprep.subr.bf16.mxu0 %v1017
    %1361 = vmatpush1.bf16.msra.mxu0 %v1016
    %1362 = vmatprep.subr.bf16.mxu0 %v1021
    %1363 = vmatpush1.bf16.msra.mxu0 %v1020
    %1364 = vmatprep.subr.bf16.mxu0 %v1025
    %1365 = vmatpush1.bf16.msra.mxu0 %v1024
    %1366 = vmatprep.subr.bf16.mxu0 %v1029
    %1367 = vmatpush1.bf16.msra.mxu0 %v1028
    %1368 = vmatprep.subr.bf16.mxu0 %v1033
    %1369 = vmatpush1.bf16.msra.mxu0 %v1032
    %1370 = vmatprep.subr.bf16.mxu0 %v1037
    %1371 = vmatpush1.bf16.msra.mxu0 %v1036
    %1372 = vmatprep.subr.bf16.mxu0 %v1041
    %1373 = vmatpush1.bf16.msra.mxu0 %v1040
    %1374 = vmatprep.subr.bf16.mxu0 %v1045
    %1375 = vmatpush1.bf16.msra.mxu0 %v1044
    %1376 = vmatprep.subr.bf16.mxu0 %v1049
    %1377 = vmatpush1.bf16.msra.mxu0 %v1048
    %1378 = vmatprep.subr.bf16.mxu0 %v1053
    %1379 = vmatpush1.bf16.msra.mxu0 %v1052
    %1380 = vmatprep.subr.bf16.mxu0 %v1057
    %1381 = vmatpush1.bf16.msra.mxu0 %v1056
    %1382 = vmatprep.mubr.bf16.mxu0 %v60
    %1383 = vmatmul.mubr.bf16.gmra.mrb[0].mxu0 %v59
    %v1384 = vpop.f32.mrb[0].mxu0
    %v1385 = vadd.f32 %v1342, %v1384
    %v1386 = vpop.f32.mrb[0].mxu0
    %v1387 = vadd.f32 %v1344, %v1386
    %v1388 = vpop.f32.mrb[0].mxu0
    %v1389 = vadd.f32 %v1346, %v1388
    %v1390 = vpop.f32.mrb[0].mxu0
    %v1391 = vadd.f32 %v1348, %v1390
    %1392 = vdwg.mxu0
    %1393 = vmatprep.subr.bf16.mxu0 %v1061
    %1394 = vmatpush1.bf16.msra.mxu0 %v1060
    %1395 = vmatprep.subr.bf16.mxu0 0
    %1396 = vmatpush1.bf16.msra.mxu0 0
    %1397 = vmatprep.subr.bf16.mxu0 0
    %1398 = vmatpush1.bf16.msra.mxu0 0
    %1399 = vmatprep.subr.bf16.mxu0 0
    %1400 = vmatpush1.bf16.msra.mxu0 0
    %1401 = vmatprep.subr.bf16.mxu0 0
    %1402 = vmatpush1.bf16.msra.mxu0 0
    %1403 = vmatprep.subr.bf16.mxu0 0
    %1404 = vmatpush1.bf16.msra.mxu0 0
    %1405 = vmatprep.subr.bf16.mxu0 0
    %1406 = vmatpush1.bf16.msra.mxu0 0
    %1407 = vmatprep.subr.bf16.mxu0 0
    %1408 = vmatpush1.bf16.msra.mxu0 0
    %1409 = vmatprep.subr.bf16.mxu0 0
    %1410 = vmatpush1.bf16.msra.mxu0 0
    %1411 = vmatprep.subr.bf16.mxu0 0
    %1412 = vmatpush1.bf16.msra.mxu0 0
    %1413 = vmatprep.subr.bf16.mxu0 0
    %1414 = vmatpush1.bf16.msra.mxu0 0
    %1415 = vmatprep.subr.bf16.mxu0 0
    %1416 = vmatpush1.bf16.msra.mxu0 0
    %1417 = vmatprep.subr.bf16.mxu0 0
    %1418 = vmatpush1.bf16.msra.mxu0 0
    %1419 = vmatprep.subr.bf16.mxu0 0
    %1420 = vmatpush1.bf16.msra.mxu0 0
    %1421 = vmatprep.subr.bf16.mxu0 0
    %1422 = vmatpush1.bf16.msra.mxu0 0
    %1423 = vmatprep.subr.bf16.mxu0 0
    %1424 = vmatpush1.bf16.msra.mxu0 0
    %1425 = vmatprep.mubr.bf16.mxu0 0
    %1426 = vmatmul.mubr.bf16.gmra.mrb[0].mxu0 %v1262
    %v1427 = vpop.f32.mrb[0].mxu0
    %v1428 = vadd.f32 %v1385, %v1427
    %v1429 = vpop.f32.mrb[0].mxu0
    %v1430 = vadd.f32 %v1387, %v1429
    %v1431 = vpop.f32.mrb[0].mxu0
    %v1432 = vadd.f32 %v1389, %v1431
    %v1433 = vpop.f32.mrb[0].mxu0
    %v1434 = vadd.f32 %v1391, %v1433
    %1435 = vdwg.mxu0
    %1436 = vmatprep.subr.bf16.mxu0 %v871
    %1437 = vmatpush1.bf16.msra.mxu0 %v870
    %1438 = vmatprep.subr.bf16.mxu0 %v875
    %1439 = vmatpush1.bf16.msra.mxu0 %v874
    %1440 = vmatprep.subr.bf16.mxu0 %v879
    %1441 = vmatpush1.bf16.msra.mxu0 %v878
    %1442 = vmatprep.subr.bf16.mxu0 %v883
    %1443 = vmatpush1.bf16.msra.mxu0 %v882
    %1444 = vmatprep.subr.bf16.mxu0 %v887
    %1445 = vmatpush1.bf16.msra.mxu0 %v886
    %1446 = vmatprep.subr.bf16.mxu0 %v891
    %1447 = vmatpush1.bf16.msra.mxu0 %v890
    %1448 = vmatprep.subr.bf16.mxu0 %v895
    %1449 = vmatpush1.bf16.msra.mxu0 %v894
    %1450 = vmatprep.subr.bf16.mxu0 %v899
    %1451 = vmatpush1.bf16.msra.mxu0 %v898
    %1452 = vmatprep.subr.bf16.mxu0 %v903
    %1453 = vmatpush1.bf16.msra.mxu0 %v902
    %1454 = vmatprep.subr.bf16.mxu0 %v907
    %1455 = vmatpush1.bf16.msra.mxu0 %v906
    %1456 = vmatprep.subr.bf16.mxu0 %v911
    %1457 = vmatpush1.bf16.msra.mxu0 %v910
    %1458 = vmatprep.subr.bf16.mxu0 %v915
    %1459 = vmatpush1.bf16.msra.mxu0 %v914
    %1460 = vmatprep.subr.bf16.mxu0 %v919
    %1461 = vmatpush1.bf16.msra.mxu0 %v918
    %1462 = vmatprep.subr.bf16.mxu0 %v923
    %1463 = vmatpush1.bf16.msra.mxu0 %v922
    %1464 = vmatprep.subr.bf16.mxu0 %v927
    %1465 = vmatpush1.bf16.msra.mxu0 %v926
    %1466 = vmatprep.subr.bf16.mxu0 %v931
    %1467 = vmatpush1.bf16.msra.mxu0 %v930
    %1468 = vmatprep.mubr.bf16.mxu0 %v56
    %1469 = vmatmul.mubr.bf16.gmra.mrb[0].mxu0 %v55
    %v1470 = vpop.f32.mrb[0].mxu0
    %v1471 = vadd.f32 %v271, %v1470
    %v1472 = vpop.f32.mrb[0].mxu0
    %v1473 = vadd.f32 %v275, %v1472
    %v1474 = vpop.f32.mrb[0].mxu0
    %v1475 = vadd.f32 %v271, %v1474
    %v1476 = vpop.f32.mrb[0].mxu0
    %v1477 = vadd.f32 %v275, %v1476
    %1478 = vdwg.mxu0
    %1479 = vmatprep.subr.bf16.mxu0 %v935
    %1480 = vmatpush1.bf16.msra.mxu0 %v934
    %1481 = vmatprep.subr.bf16.mxu0 %v939
    %1482 = vmatpush1.bf16.msra.mxu0 %v938
    %1483 = vmatprep.subr.bf16.mxu0 %v943
    %1484 = vmatpush1.bf16.msra.mxu0 %v942
    %1485 = vmatprep.subr.bf16.mxu0 %v947
    %1486 = vmatpush1.bf16.msra.mxu0 %v946
    %1487 = vmatprep.subr.bf16.mxu0 %v951
    %1488 = vmatpush1.bf16.msra.mxu0 %v950
    %1489 = vmatprep.subr.bf16.mxu0 %v955
    %1490 = vmatpush1.bf16.msra.mxu0 %v954
    %1491 = vmatprep.subr.bf16.mxu0 %v959
    %1492 = vmatpush1.bf16.msra.mxu0 %v958
    %1493 = vmatprep.subr.bf16.mxu0 %v963
    %1494 = vmatpush1.bf16.msra.mxu0 %v962
    %1495 = vmatprep.subr.bf16.mxu0 %v967
    %1496 = vmatpush1.bf16.msra.mxu0 %v966
    %1497 = vmatprep.subr.bf16.mxu0 %v971
    %1498 = vmatpush1.bf16.msra.mxu0 %v970
    %1499 = vmatprep.subr.bf16.mxu0 %v975
    %1500 = vmatpush1.bf16.msra.mxu0 %v974
    %1501 = vmatprep.subr.bf16.mxu0 %v979
    %1502 = vmatpush1.bf16.msra.mxu0 %v978
    %1503 = vmatprep.subr.bf16.mxu0 %v983
    %1504 = vmatpush1.bf16.msra.mxu0 %v982
    %1505 = vmatprep.subr.bf16.mxu0 %v987
    %1506 = vmatpush1.bf16.msra.mxu0 %v986
    %1507 = vmatprep.subr.bf16.mxu0 %v991
    %1508 = vmatpush1.bf16.msra.mxu0 %v990
    %1509 = vmatprep.subr.bf16.mxu0 %v995
    %1510 = vmatpush1.bf16.msra.mxu0 %v994
    %1511 = vmatprep.mubr.bf16.mxu0 %v58
    %1512 = vmatmul.mubr.bf16.gmra.mrb[0].mxu0 %v57
    %v1513 = vpop.f32.mrb[0].mxu0
    %v1514 = vadd.f32 %v1471, %v1513
    %v1515 = vpop.f32.mrb[0].mxu0
    %v1516 = vadd.f32 %v1473, %v1515
    %v1517 = vpop.f32.mrb[0].mxu0
    %v1518 = vadd.f32 %v1475, %v1517
    %v1519 = vpop.f32.mrb[0].mxu0
    %v1520 = vadd.f32 %v1477, %v1519
    %1521 = vdwg.mxu0
    %1522 = vmatprep.subr.bf16.mxu0 %v999
    %1523 = vmatpush1.bf16.msra.mxu0 %v998
    %1524 = vmatprep.subr.bf16.mxu0 %v1003
    %1525 = vmatpush1.bf16.msra.mxu0 %v1002
    %1526 = vmatprep.subr.bf16.mxu0 %v1007
    %1527 = vmatpush1.bf16.msra.mxu0 %v1006
    %1528 = vmatprep.subr.bf16.mxu0 %v1011
    %1529 = vmatpush1.bf16.msra.mxu0 %v1010
    %1530 = vmatprep.subr.bf16.mxu0 %v1015
    %1531 = vmatpush1.bf16.msra.mxu0 %v1014
    %1532 = vmatprep.subr.bf16.mxu0 %v1019
    %1533 = vmatpush1.bf16.msra.mxu0 %v1018
    %1534 = vmatprep.subr.bf16.mxu0 %v1023
    %1535 = vmatpush1.bf16.msra.mxu0 %v1022
    %1536 = vmatprep.subr.bf16.mxu0 %v1027
    %1537 = vmatpush1.bf16.msra.mxu0 %v1026
    %1538 = vmatprep.subr.bf16.mxu0 %v1031
    %1539 = vmatpush1.bf16.msra.mxu0 %v1030
    %1540 = vmatprep.subr.bf16.mxu0 %v1035
    %1541 = vmatpush1.bf16.msra.mxu0 %v1034
    %1542 = vmatprep.subr.bf16.mxu0 %v1039
    %1543 = vmatpush1.bf16.msra.mxu0 %v1038
    %1544 = vmatprep.subr.bf16.mxu0 %v1043
    %1545 = vmatpush1.bf16.msra.mxu0 %v1042
    %1546 = vmatprep.subr.bf16.mxu0 %v1047
    %1547 = vmatpush1.bf16.msra.mxu0 %v1046
    %1548 = vmatprep.subr.bf16.mxu0 %v1051
    %1549 = vmatpush1.bf16.msra.mxu0 %v1050
    %1550 = vmatprep.subr.bf16.mxu0 %v1055
    %1551 = vmatpush1.bf16.msra.mxu0 %v1054
    %1552 = vmatprep.subr.bf16.mxu0 %v1059
    %1553 = vmatpush1.bf16.msra.mxu0 %v1058
    %1554 = vmatprep.mubr.bf16.mxu0 %v60
    %1555 = vmatmul.mubr.bf16.gmra.mrb[0].mxu0 %v59
    %v1556 = vpop.f32.mrb[0].mxu0
    %v1557 = vadd.f32 %v1514, %v1556
    %v1558 = vpop.f32.mrb[0].mxu0
    %v1559 = vadd.f32 %v1516, %v1558
    %v1560 = vpop.f32.mrb[0].mxu0
    %v1561 = vadd.f32 %v1518, %v1560
    %v1562 = vpop.f32.mrb[0].mxu0
    %v1563 = vadd.f32 %v1520, %v1562
    %1564 = vdwg.mxu0
    %1565 = vmatprep.subr.bf16.mxu0 %v1063
    %1566 = vmatpush1.bf16.msra.mxu0 %v1062
    %1567 = vmatprep.subr.bf16.mxu0 0
    %1568 = vmatpush1.bf16.msra.mxu0 0
    %1569 = vmatprep.subr.bf16.mxu0 0
    %1570 = vmatpush1.bf16.msra.mxu0 0
    %1571 = vmatprep.subr.bf16.mxu0 0
    %1572 = vmatpush1.bf16.msra.mxu0 0
    %1573 = vmatprep.subr.bf16.mxu0 0
    %1574 = vmatpush1.bf16.msra.mxu0 0
    %1575 = vmatprep.subr.bf16.mxu0 0
    %1576 = vmatpush1.bf16.msra.mxu0 0
    %1577 = vmatprep.subr.bf16.mxu0 0
    %1578 = vmatpush1.bf16.msra.mxu0 0
    %1579 = vmatprep.subr.bf16.mxu0 0
    %1580 = vmatpush1.bf16.msra.mxu0 0
    %1581 = vmatprep.subr.bf16.mxu0 0
    %1582 = vmatpush1.bf16.msra.mxu0 0
    %1583 = vmatprep.subr.bf16.mxu0 0
    %1584 = vmatpush1.bf16.msra.mxu0 0
    %1585 = vmatprep.subr.bf16.mxu0 0
    %1586 = vmatpush1.bf16.msra.mxu0 0
    %1587 = vmatprep.subr.bf16.mxu0 0
    %1588 = vmatpush1.bf16.msra.mxu0 0
    %1589 = vmatprep.subr.bf16.mxu0 0
    %1590 = vmatpush1.bf16.msra.mxu0 0
    %1591 = vmatprep.subr.bf16.mxu0 0
    %1592 = vmatpush1.bf16.msra.mxu0 0
    %1593 = vmatprep.subr.bf16.mxu0 0
    %1594 = vmatpush1.bf16.msra.mxu0 0
    %1595 = vmatprep.subr.bf16.mxu0 0
    %1596 = vmatpush1.bf16.msra.mxu0 0
    %1597 = vmatprep.mubr.bf16.mxu0 0
    %1598 = vmatmul.mubr.bf16.gmra.mrb[0].mxu0 %v1262
    %v1599 = vpop.f32.mrb[0].mxu0
    %v1600 = vadd.f32 %v1557, %v1599
    %v1601 = vpop.f32.mrb[0].mxu0
    %v1602 = vadd.f32 %v1559, %v1601
    %v1603 = vpop.f32.mrb[0].mxu0
    %v1604 = vadd.f32 %v1561, %v1603
    %v1605 = vpop.f32.mrb[0].mxu0
    %v1606 = vadd.f32 %v1563, %v1605
    %1607 = vdwg.mxu0
    %v1608 = vmax.f32 %v1428, 0.0
    %v1609 = vmax.f32 %v1430, 0.0
    %v1610 = vmax.f32 %v1600, 0.0
    %v1611 = vmax.f32 %v1602, 0.0
    %v1612 = vmax.f32 %v1432, 0.0
    %v1613 = vmax.f32 %v1434, 0.0
    %v1614 = vmax.f32 %v1604, 0.0
    %v1615 = vmax.f32 %v1606, 0.0
    %v1616 = vpack.c.bf16 %v1612, %v1608
    %v1617 = vpack.c.bf16 %v1613, %v1609
    %v1618 = vpack.c.bf16 %v1614, %v1610
    %v1619 = vpack.c.bf16 %v1615, %v1611
    %v1620 = vld [vmem:[%s3] sm:$0xff]
    %v1621 = vld [vmem:[%s3 + $0x8] sm:$0xff]
    %v1622 = vld [vmem:[%s3 + $0x10] sm:$0xff]
    %v1623 = vld [vmem:[%s3 + $0x18] sm:$0xff]
    %v1624 = vld [vmem:[%s3 + $0x20] sm:$0xff]
    %v1625 = vld [vmem:[%s3 + $0x28] sm:$0xff]
    %v1626 = vld [vmem:[%s3 + $0x30] sm:$0xff]
    %v1627 = vld [vmem:[%s3 + $0x38] sm:$0xff]
    %v1628 = vld [vmem:[%s3 + $0x40] sm:$0xff]
    %v1629 = vld [vmem:[%s3 + $0x48] sm:$0xff]
    %v1630 = vld [vmem:[%s3 + $0x50] sm:$0xff]
    %v1631 = vld [vmem:[%s3 + $0x58] sm:$0xff]
    %v1632 = vld [vmem:[%s3 + $0x60] sm:$0xff]
    %v1633 = vld [vmem:[%s3 + $0x68] sm:$0xff]
    %v1634 = vld [vmem:[%s3 + $0x70] sm:$0xff]
    %v1635 = vld [vmem:[%s3 + $0x78] sm:$0xff]
    %v1636 = vld [vmem:[%s3 + $0x80] sm:$0xff]
    %v1637 = vld [vmem:[%s3 + $0x88] sm:$0xff]
    %v1638 = vld [vmem:[%s3 + $0x90] sm:$0xff]
    %v1639 = vld [vmem:[%s3 + $0x98] sm:$0xff]
    %v1640 = vld [vmem:[%s3 + $0xa0] sm:$0xff]
    %v1641 = vld [vmem:[%s3 + $0xa8] sm:$0xff]
    %v1642 = vld [vmem:[%s3 + $0xb0] sm:$0xff]
    %v1643 = vld [vmem:[%s3 + $0xb8] sm:$0xff]
    %v1644 = vld [vmem:[%s3 + $0xc0] sm:$0xff]
    %v1645 = vld [vmem:[%s3 + $0xc8] sm:$0xff]
    %v1646 = vld [vmem:[%s3 + $0xd0] sm:$0xff]
    %v1647 = vld [vmem:[%s3 + $0xd8] sm:$0xff]
    %v1648 = vld [vmem:[%s3 + $0xe0] sm:$0xff]
    %v1649 = vld [vmem:[%s3 + $0xe8] sm:$0xff]
    %v1650 = vld [vmem:[%s3 + $0xf0] sm:$0xff]
    %v1651 = vld [vmem:[%s3 + $0xf8] sm:$0xff]
    %v1652 = vld [vmem:[%s3 + $0x100] sm:$0xff]
    %v1653 = vld [vmem:[%s3 + $0x108] sm:$0xff]
    %v1654 = vld [vmem:[%s3 + $0x110] sm:$0xff]
    %v1655 = vld [vmem:[%s3 + $0x118] sm:$0xff]
    %v1656 = vld [vmem:[%s3 + $0x120] sm:$0xff]
    %v1657 = vld [vmem:[%s3 + $0x128] sm:$0xff]
    %v1658 = vld [vmem:[%s3 + $0x130] sm:$0xff]
    %v1659 = vld [vmem:[%s3 + $0x138] sm:$0xff]
    %v1660 = vld [vmem:[%s3 + $0x140] sm:$0xff]
    %v1661 = vld [vmem:[%s3 + $0x148] sm:$0xff]
    %v1662 = vld [vmem:[%s3 + $0x150] sm:$0xff]
    %v1663 = vld [vmem:[%s3 + $0x158] sm:$0xff]
    %v1664 = vld [vmem:[%s3 + $0x160] sm:$0xff]
    %v1665 = vld [vmem:[%s3 + $0x168] sm:$0xff]
    %v1666 = vld [vmem:[%s3 + $0x170] sm:$0xff]
    %v1667 = vld [vmem:[%s3 + $0x178] sm:$0xff]
    %v1668 = vld [vmem:[%s3 + $0x180] sm:$0xff]
    %v1669 = vld [vmem:[%s3 + $0x188] sm:$0xff]
    %v1670 = vld [vmem:[%s3 + $0x190] sm:$0xff]
    %v1671 = vld [vmem:[%s3 + $0x198] sm:$0xff]
    %v1672 = vld [vmem:[%s3 + $0x1a0] sm:$0xff]
    %v1673 = vld [vmem:[%s3 + $0x1a8] sm:$0xff]
    %v1674 = vld [vmem:[%s3 + $0x1b0] sm:$0xff]
    %v1675 = vld [vmem:[%s3 + $0x1b8] sm:$0xff]
    %v1676 = vld [vmem:[%s3 + $0x1c0] sm:$0xff]
    %v1677 = vld [vmem:[%s3 + $0x1c8] sm:$0xff]
    %v1678 = vld [vmem:[%s3 + $0x1d0] sm:$0xff]
    %v1679 = vld [vmem:[%s3 + $0x1d8] sm:$0xff]
    %v1680 = vld [vmem:[%s3 + $0x1e0] sm:$0xff]
    %v1681 = vld [vmem:[%s3 + $0x1e8] sm:$0xff]
    %v1682 = vld [vmem:[%s3 + $0x1f0] sm:$0xff]
    %v1683 = vld [vmem:[%s3 + $0x1f8] sm:$0xff]
    %v1684 = vld [vmem:[%s4] sm:$0x3]
    %v1686 = vlaneseq
    %v1687 = vshrl.u32 %v1686, 7
    %v1688 = vsub.s32 0, %v1687
    %v1689 = vrot.slane %v1684, %v1688
    %v1690 = vlaneseq
    %v1691 = vshrl.u32 %v1690, 7
    %v1692 = vsub.s32 1, %v1691
    %v1693 = vrot.slane %v1684, %v1692
    %v1760 = vunpack.c.l.b16 %v1620
    %v1761 = vunpack.c.h.b16 %v1620
    %v1762 = vunpack.c.l.b16 %v1621
    %v1763 = vunpack.c.h.b16 %v1621
    %v1764 = vunpack.c.l.b16 %v1622
    %v1765 = vunpack.c.h.b16 %v1622
    %v1766 = vunpack.c.l.b16 %v1623
    %v1767 = vunpack.c.h.b16 %v1623
    %v1768 = vunpack.c.l.b16 %v1624
    %v1769 = vunpack.c.h.b16 %v1624
    %v1770 = vunpack.c.l.b16 %v1625
    %v1771 = vunpack.c.h.b16 %v1625
    %v1772 = vunpack.c.l.b16 %v1626
    %v1773 = vunpack.c.h.b16 %v1626
    %v1774 = vunpack.c.l.b16 %v1627
    %v1775 = vunpack.c.h.b16 %v1627
    %v1776 = vunpack.c.l.b16 %v1628
    %v1777 = vunpack.c.h.b16 %v1628
    %v1778 = vunpack.c.l.b16 %v1629
    %v1779 = vunpack.c.h.b16 %v1629
    %v1780 = vunpack.c.l.b16 %v1630
    %v1781 = vunpack.c.h.b16 %v1630
    %v1782 = vunpack.c.l.b16 %v1631
    %v1783 = vunpack.c.h.b16 %v1631
    %v1784 = vunpack.c.l.b16 %v1632
    %v1785 = vunpack.c.h.b16 %v1632
    %v1786 = vunpack.c.l.b16 %v1633
    %v1787 = vunpack.c.h.b16 %v1633
    %v1788 = vunpack.c.l.b16 %v1634
    %v1789 = vunpack.c.h.b16 %v1634
    %v1790 = vunpack.c.l.b16 %v1635
    %v1791 = vunpack.c.h.b16 %v1635
    %v1792 = vunpack.c.l.b16 %v1636
    %v1793 = vunpack.c.h.b16 %v1636
    %v1794 = vunpack.c.l.b16 %v1637
    %v1795 = vunpack.c.h.b16 %v1637
    %v1796 = vunpack.c.l.b16 %v1638
    %v1797 = vunpack.c.h.b16 %v1638
    %v1798 = vunpack.c.l.b16 %v1639
    %v1799 = vunpack.c.h.b16 %v1639
    %v1800 = vunpack.c.l.b16 %v1640
    %v1801 = vunpack.c.h.b16 %v1640
    %v1802 = vunpack.c.l.b16 %v1641
    %v1803 = vunpack.c.h.b16 %v1641
    %v1804 = vunpack.c.l.b16 %v1642
    %v1805 = vunpack.c.h.b16 %v1642
    %v1806 = vunpack.c.l.b16 %v1643
    %v1807 = vunpack.c.h.b16 %v1643
    %v1808 = vunpack.c.l.b16 %v1644
    %v1809 = vunpack.c.h.b16 %v1644
    %v1810 = vunpack.c.l.b16 %v1645
    %v1811 = vunpack.c.h.b16 %v1645
    %v1812 = vunpack.c.l.b16 %v1646
    %v1813 = vunpack.c.h.b16 %v1646
    %v1814 = vunpack.c.l.b16 %v1647
    %v1815 = vunpack.c.h.b16 %v1647
    %v1816 = vunpack.c.l.b16 %v1648
    %v1817 = vunpack.c.h.b16 %v1648
    %v1818 = vunpack.c.l.b16 %v1649
    %v1819 = vunpack.c.h.b16 %v1649
    %v1820 = vunpack.c.l.b16 %v1650
    %v1821 = vunpack.c.h.b16 %v1650
    %v1822 = vunpack.c.l.b16 %v1651
    %v1823 = vunpack.c.h.b16 %v1651
    %v1824 = vunpack.c.l.b16 %v1652
    %v1825 = vunpack.c.h.b16 %v1652
    %v1826 = vunpack.c.l.b16 %v1653
    %v1827 = vunpack.c.h.b16 %v1653
    %v1828 = vunpack.c.l.b16 %v1654
    %v1829 = vunpack.c.h.b16 %v1654
    %v1830 = vunpack.c.l.b16 %v1655
    %v1831 = vunpack.c.h.b16 %v1655
    %v1832 = vunpack.c.l.b16 %v1656
    %v1833 = vunpack.c.h.b16 %v1656
    %v1834 = vunpack.c.l.b16 %v1657
    %v1835 = vunpack.c.h.b16 %v1657
    %v1836 = vunpack.c.l.b16 %v1658
    %v1837 = vunpack.c.h.b16 %v1658
    %v1838 = vunpack.c.l.b16 %v1659
    %v1839 = vunpack.c.h.b16 %v1659
    %v1840 = vunpack.c.l.b16 %v1660
    %v1841 = vunpack.c.h.b16 %v1660
    %v1842 = vunpack.c.l.b16 %v1661
    %v1843 = vunpack.c.h.b16 %v1661
    %v1844 = vunpack.c.l.b16 %v1662
    %v1845 = vunpack.c.h.b16 %v1662
    %v1846 = vunpack.c.l.b16 %v1663
    %v1847 = vunpack.c.h.b16 %v1663
    %v1848 = vunpack.c.l.b16 %v1664
    %v1849 = vunpack.c.h.b16 %v1664
    %v1850 = vunpack.c.l.b16 %v1665
    %v1851 = vunpack.c.h.b16 %v1665
    %v1852 = vunpack.c.l.b16 %v1666
    %v1853 = vunpack.c.h.b16 %v1666
    %v1854 = vunpack.c.l.b16 %v1667
    %v1855 = vunpack.c.h.b16 %v1667
    %v1856 = vunpack.c.l.b16 %v1668
    %v1857 = vunpack.c.h.b16 %v1668
    %v1858 = vunpack.c.l.b16 %v1669
    %v1859 = vunpack.c.h.b16 %v1669
    %v1860 = vunpack.c.l.b16 %v1670
    %v1861 = vunpack.c.h.b16 %v1670
    %v1862 = vunpack.c.l.b16 %v1671
    %v1863 = vunpack.c.h.b16 %v1671
    %v1864 = vunpack.c.l.b16 %v1672
    %v1865 = vunpack.c.h.b16 %v1672
    %v1866 = vunpack.c.l.b16 %v1673
    %v1867 = vunpack.c.h.b16 %v1673
    %v1868 = vunpack.c.l.b16 %v1674
    %v1869 = vunpack.c.h.b16 %v1674
    %v1870 = vunpack.c.l.b16 %v1675
    %v1871 = vunpack.c.h.b16 %v1675
    %v1872 = vunpack.c.l.b16 %v1676
    %v1873 = vunpack.c.h.b16 %v1676
    %v1874 = vunpack.c.l.b16 %v1677
    %v1875 = vunpack.c.h.b16 %v1677
    %v1876 = vunpack.c.l.b16 %v1678
    %v1877 = vunpack.c.h.b16 %v1678
    %v1878 = vunpack.c.l.b16 %v1679
    %v1879 = vunpack.c.h.b16 %v1679
    %v1880 = vunpack.c.l.b16 %v1680
    %v1881 = vunpack.c.h.b16 %v1680
    %v1882 = vunpack.c.l.b16 %v1681
    %v1883 = vunpack.c.h.b16 %v1681
    %v1884 = vunpack.c.l.b16 %v1682
    %v1885 = vunpack.c.h.b16 %v1682
    %v1886 = vunpack.c.l.b16 %v1683
    %v1887 = vunpack.c.h.b16 %v1683
    %v1888 = vpack.c.b16 %v1762, %v1760
    %v1889 = vpack.c.b16 %v1763, %v1761
    %v1890 = vpack.c.b16 %v1766, %v1764
    %v1891 = vpack.c.b16 %v1767, %v1765
    %v1892 = vpack.c.b16 %v1770, %v1768
    %v1893 = vpack.c.b16 %v1771, %v1769
    %v1894 = vpack.c.b16 %v1774, %v1772
    %v1895 = vpack.c.b16 %v1775, %v1773
    %v1896 = vpack.c.b16 %v1778, %v1776
    %v1897 = vpack.c.b16 %v1779, %v1777
    %v1898 = vpack.c.b16 %v1782, %v1780
    %v1899 = vpack.c.b16 %v1783, %v1781
    %v1900 = vpack.c.b16 %v1786, %v1784
    %v1901 = vpack.c.b16 %v1787, %v1785
    %v1902 = vpack.c.b16 %v1790, %v1788
    %v1903 = vpack.c.b16 %v1791, %v1789
    %v1904 = vpack.c.b16 %v1794, %v1792
    %v1905 = vpack.c.b16 %v1795, %v1793
    %v1906 = vpack.c.b16 %v1798, %v1796
    %v1907 = vpack.c.b16 %v1799, %v1797
    %v1908 = vpack.c.b16 %v1802, %v1800
    %v1909 = vpack.c.b16 %v1803, %v1801
    %v1910 = vpack.c.b16 %v1806, %v1804
    %v1911 = vpack.c.b16 %v1807, %v1805
    %v1912 = vpack.c.b16 %v1810, %v1808
    %v1913 = vpack.c.b16 %v1811, %v1809
    %v1914 = vpack.c.b16 %v1814, %v1812
    %v1915 = vpack.c.b16 %v1815, %v1813
    %v1916 = vpack.c.b16 %v1818, %v1816
    %v1917 = vpack.c.b16 %v1819, %v1817
    %v1918 = vpack.c.b16 %v1822, %v1820
    %v1919 = vpack.c.b16 %v1823, %v1821
    %v1920 = vpack.c.b16 %v1826, %v1824
    %v1921 = vpack.c.b16 %v1827, %v1825
    %v1922 = vpack.c.b16 %v1830, %v1828
    %v1923 = vpack.c.b16 %v1831, %v1829
    %v1924 = vpack.c.b16 %v1834, %v1832
    %v1925 = vpack.c.b16 %v1835, %v1833
    %v1926 = vpack.c.b16 %v1838, %v1836
    %v1927 = vpack.c.b16 %v1839, %v1837
    %v1928 = vpack.c.b16 %v1842, %v1840
    %v1929 = vpack.c.b16 %v1843, %v1841
    %v1930 = vpack.c.b16 %v1846, %v1844
    %v1931 = vpack.c.b16 %v1847, %v1845
    %v1932 = vpack.c.b16 %v1850, %v1848
    %v1933 = vpack.c.b16 %v1851, %v1849
    %v1934 = vpack.c.b16 %v1854, %v1852
    %v1935 = vpack.c.b16 %v1855, %v1853
    %v1936 = vpack.c.b16 %v1858, %v1856
    %v1937 = vpack.c.b16 %v1859, %v1857
    %v1938 = vpack.c.b16 %v1862, %v1860
    %v1939 = vpack.c.b16 %v1863, %v1861
    %v1940 = vpack.c.b16 %v1866, %v1864
    %v1941 = vpack.c.b16 %v1867, %v1865
    %v1942 = vpack.c.b16 %v1870, %v1868
    %v1943 = vpack.c.b16 %v1871, %v1869
    %v1944 = vpack.c.b16 %v1874, %v1872
    %v1945 = vpack.c.b16 %v1875, %v1873
    %v1946 = vpack.c.b16 %v1878, %v1876
    %v1947 = vpack.c.b16 %v1879, %v1877
    %v1948 = vpack.c.b16 %v1882, %v1880
    %v1949 = vpack.c.b16 %v1883, %v1881
    %v1950 = vpack.c.b16 %v1886, %v1884
    %v1951 = vpack.c.b16 %v1887, %v1885
    %2016 = vmatprep.subr.bf16.mxu0 %v1889
    %2017 = vmatpush1.bf16.msra.mxu0 %v1888
    %2018 = vmatprep.subr.bf16.mxu0 %v1891
    %2019 = vmatpush1.bf16.msra.mxu0 %v1890
    %2020 = vmatprep.subr.bf16.mxu0 %v1893
    %2021 = vmatpush1.bf16.msra.mxu0 %v1892
    %2022 = vmatprep.subr.bf16.mxu0 %v1895
    %2023 = vmatpush1.bf16.msra.mxu0 %v1894
    %2024 = vmatprep.subr.bf16.mxu0 %v1897
    %2025 = vmatpush1.bf16.msra.mxu0 %v1896
    %2026 = vmatprep.subr.bf16.mxu0 %v1899
    %2027 = vmatpush1.bf16.msra.mxu0 %v1898
    %2028 = vmatprep.subr.bf16.mxu0 %v1901
    %2029 = vmatpush1.bf16.msra.mxu0 %v1900
    %2030 = vmatprep.subr.bf16.mxu0 %v1903
    %2031 = vmatpush1.bf16.msra.mxu0 %v1902
    %2032 = vmatprep.subr.bf16.mxu0 %v1905
    %2033 = vmatpush1.bf16.msra.mxu0 %v1904
    %2034 = vmatprep.subr.bf16.mxu0 %v1907
    %2035 = vmatpush1.bf16.msra.mxu0 %v1906
    %2036 = vmatprep.subr.bf16.mxu0 %v1909
    %2037 = vmatpush1.bf16.msra.mxu0 %v1908
    %2038 = vmatprep.subr.bf16.mxu0 %v1911
    %2039 = vmatpush1.bf16.msra.mxu0 %v1910
    %2040 = vmatprep.subr.bf16.mxu0 %v1913
    %2041 = vmatpush1.bf16.msra.mxu0 %v1912
    %2042 = vmatprep.subr.bf16.mxu0 %v1915
    %2043 = vmatpush1.bf16.msra.mxu0 %v1914
    %2044 = vmatprep.subr.bf16.mxu0 %v1917
    %2045 = vmatpush1.bf16.msra.mxu0 %v1916
    %2046 = vmatprep.subr.bf16.mxu0 %v1919
    %2047 = vmatpush1.bf16.msra.mxu0 %v1918
    %2048 = vmatprep.mubr.bf16.mxu0 %v1617
    %2049 = vmatmul.mubr.bf16.gmra.mrb[0].mxu0 %v1616
    %v2050 = vpop.f32.mrb[0].mxu0
    %v2051 = vadd.f32 %v1689, %v2050
    %v2052 = vpop.f32.mrb[0].mxu0
    %v2053 = vadd.f32 %v1693, %v2052
    %v2054 = vpop.f32.mrb[0].mxu0
    %v2055 = vadd.f32 %v1689, %v2054
    %v2056 = vpop.f32.mrb[0].mxu0
    %v2057 = vadd.f32 %v1693, %v2056
    %2058 = vdwg.mxu0
    %2059 = vmatprep.subr.bf16.mxu0 %v1921
    %2060 = vmatpush1.bf16.msra.mxu0 %v1920
    %2061 = vmatprep.subr.bf16.mxu0 %v1923
    %2062 = vmatpush1.bf16.msra.mxu0 %v1922
    %2063 = vmatprep.subr.bf16.mxu0 %v1925
    %2064 = vmatpush1.bf16.msra.mxu0 %v1924
    %2065 = vmatprep.subr.bf16.mxu0 %v1927
    %2066 = vmatpush1.bf16.msra.mxu0 %v1926
    %2067 = vmatprep.subr.bf16.mxu0 %v1929
    %2068 = vmatpush1.bf16.msra.mxu0 %v1928
    %2069 = vmatprep.subr.bf16.mxu0 %v1931
    %2070 = vmatpush1.bf16.msra.mxu0 %v1930
    %2071 = vmatprep.subr.bf16.mxu0 %v1933
    %2072 = vmatpush1.bf16.msra.mxu0 %v1932
    %2073 = vmatprep.subr.bf16.mxu0 %v1935
    %2074 = vmatpush1.bf16.msra.mxu0 %v1934
    %2075 = vmatprep.subr.bf16.mxu0 %v1937
    %2076 = vmatpush1.bf16.msra.mxu0 %v1936
    %2077 = vmatprep.subr.bf16.mxu0 %v1939
    %2078 = vmatpush1.bf16.msra.mxu0 %v1938
    %2079 = vmatprep.subr.bf16.mxu0 %v1941
    %2080 = vmatpush1.bf16.msra.mxu0 %v1940
    %2081 = vmatprep.subr.bf16.mxu0 %v1943
    %2082 = vmatpush1.bf16.msra.mxu0 %v1942
    %2083 = vmatprep.subr.bf16.mxu0 %v1945
    %2084 = vmatpush1.bf16.msra.mxu0 %v1944
    %2085 = vmatprep.subr.bf16.mxu0 %v1947
    %2086 = vmatpush1.bf16.msra.mxu0 %v1946
    %2087 = vmatprep.subr.bf16.mxu0 %v1949
    %2088 = vmatpush1.bf16.msra.mxu0 %v1948
    %2089 = vmatprep.subr.bf16.mxu0 %v1951
    %2090 = vmatpush1.bf16.msra.mxu0 %v1950
    %2091 = vmatprep.mubr.bf16.mxu0 %v1619
    %2092 = vmatmul.mubr.bf16.gmra.mrb[0].mxu0 %v1618
    %v2093 = vpop.f32.mrb[0].mxu0
    %v2094 = vadd.f32 %v2051, %v2093
    %v2095 = vpop.f32.mrb[0].mxu0
    %v2096 = vadd.f32 %v2053, %v2095
    %v2097 = vpop.f32.mrb[0].mxu0
    %v2098 = vadd.f32 %v2055, %v2097
    %v2099 = vpop.f32.mrb[0].mxu0
    %v2100 = vadd.f32 %v2057, %v2099
    %2101 = vdwg.mxu0
    %v2102 = vmax.f32 %v2094, 0.0
    %v2103 = vmax.f32 %v2096, 0.0
    %v2104 = vmax.f32 %v2098, 0.0
    %v2105 = vmax.f32 %v2100, 0.0
    %v2106 = vpack.c.bf16 %v2104, %v2102
    %v2107 = vpack.c.bf16 %v2105, %v2103
    %v2108 = vld [vmem:[%s5] sm:$0xf]
    %v2109 = vld [vmem:[%s5 + $0x4] sm:$0xf]
    %v2110 = vld [vmem:[%s5 + $0x8] sm:$0xf]
    %v2111 = vld [vmem:[%s5 + $0xc] sm:$0xf]
    %v2112 = vld [vmem:[%s5 + $0x10] sm:$0xf]
    %v2113 = vld [vmem:[%s5 + $0x14] sm:$0xf]
    %v2114 = vld [vmem:[%s5 + $0x18] sm:$0xf]
    %v2115 = vld [vmem:[%s5 + $0x1c] sm:$0xf]
    %v2116 = vld [vmem:[%s5 + $0x20] sm:$0xf]
    %v2117 = vld [vmem:[%s5 + $0x24] sm:$0xf]
    %v2118 = vld [vmem:[%s5 + $0x28] sm:$0xf]
    %v2119 = vld [vmem:[%s5 + $0x2c] sm:$0xf]
    %v2120 = vld [vmem:[%s5 + $0x30] sm:$0xf]
    %v2121 = vld [vmem:[%s5 + $0x34] sm:$0xf]
    %v2122 = vld [vmem:[%s5 + $0x38] sm:$0xf]
    %v2123 = vld [vmem:[%s5 + $0x3c] sm:$0xf]
    %v2124 = vld [vmem:[%s5 + $0x40] sm:$0xf]
    %v2125 = vld [vmem:[%s5 + $0x44] sm:$0xf]
    %v2126 = vld [vmem:[%s5 + $0x48] sm:$0xf]
    %v2127 = vld [vmem:[%s5 + $0x4c] sm:$0xf]
    %v2128 = vld [vmem:[%s5 + $0x50] sm:$0xf]
    %v2129 = vld [vmem:[%s5 + $0x54] sm:$0xf]
    %v2130 = vld [vmem:[%s5 + $0x58] sm:$0xf]
    %v2131 = vld [vmem:[%s5 + $0x5c] sm:$0xf]
    %v2132 = vld [vmem:[%s5 + $0x60] sm:$0xf]
    %v2133 = vld [vmem:[%s5 + $0x64] sm:$0xf]
    %v2134 = vld [vmem:[%s5 + $0x68] sm:$0xf]
    %v2135 = vld [vmem:[%s5 + $0x6c] sm:$0xf]
    %v2136 = vld [vmem:[%s5 + $0x70] sm:$0xf]
    %v2137 = vld [vmem:[%s5 + $0x74] sm:$0xf]
    %v2138 = vld [vmem:[%s5 + $0x78] sm:$0xf]
    %v2139 = vld [vmem:[%s5 + $0x7c] sm:$0xf]
    %v2140 = vld [vmem:[%s6] sm:$0x1]
    %v2142 = vlaneseq
    %v2143 = vshrl.u32 %v2142, 7
    %v2144 = vsub.s32 0, %v2143
    %v2145 = vrot.slane %v2140, %v2144
    %v2179 = vunpack.c.l.b16 %v2108
    %v2180 = vunpack.c.l.b16 %v2109
    %v2181 = vunpack.c.l.b16 %v2110
    %v2182 = vunpack.c.l.b16 %v2111
    %v2183 = vunpack.c.l.b16 %v2112
    %v2184 = vunpack.c.l.b16 %v2113
    %v2185 = vunpack.c.l.b16 %v2114
    %v2186 = vunpack.c.l.b16 %v2115
    %v2187 = vunpack.c.l.b16 %v2116
    %v2188 = vunpack.c.l.b16 %v2117
    %v2189 = vunpack.c.l.b16 %v2118
    %v2190 = vunpack.c.l.b16 %v2119
    %v2191 = vunpack.c.l.b16 %v2120
    %v2192 = vunpack.c.l.b16 %v2121
    %v2193 = vunpack.c.l.b16 %v2122
    %v2194 = vunpack.c.l.b16 %v2123
    %v2195 = vunpack.c.l.b16 %v2124
    %v2196 = vunpack.c.l.b16 %v2125
    %v2197 = vunpack.c.l.b16 %v2126
    %v2198 = vunpack.c.l.b16 %v2127
    %v2199 = vunpack.c.l.b16 %v2128
    %v2200 = vunpack.c.l.b16 %v2129
    %v2201 = vunpack.c.l.b16 %v2130
    %v2202 = vunpack.c.l.b16 %v2131
    %v2203 = vunpack.c.l.b16 %v2132
    %v2204 = vunpack.c.l.b16 %v2133
    %v2205 = vunpack.c.l.b16 %v2134
    %v2206 = vunpack.c.l.b16 %v2135
    %v2207 = vunpack.c.l.b16 %v2136
    %v2208 = vunpack.c.l.b16 %v2137
    %v2209 = vunpack.c.l.b16 %v2138
    %v2210 = vunpack.c.l.b16 %v2139
    %v2211 = vpack.c.b16 %v2180, %v2179
    %v2212 = vpack.c.b16 %v2182, %v2181
    %v2213 = vpack.c.b16 %v2184, %v2183
    %v2214 = vpack.c.b16 %v2186, %v2185
    %v2215 = vpack.c.b16 %v2188, %v2187
    %v2216 = vpack.c.b16 %v2190, %v2189
    %v2217 = vpack.c.b16 %v2192, %v2191
    %v2218 = vpack.c.b16 %v2194, %v2193
    %v2219 = vpack.c.b16 %v2196, %v2195
    %v2220 = vpack.c.b16 %v2198, %v2197
    %v2221 = vpack.c.b16 %v2200, %v2199
    %v2222 = vpack.c.b16 %v2202, %v2201
    %v2223 = vpack.c.b16 %v2204, %v2203
    %v2224 = vpack.c.b16 %v2206, %v2205
    %v2225 = vpack.c.b16 %v2208, %v2207
    %v2226 = vpack.c.b16 %v2210, %v2209
    %2243 = vmatprep.subr.bf16.mxu0 0
    %2244 = vmatpush1.bf16.msra.mxu0 %v2211
    %2245 = vmatprep.subr.bf16.mxu0 0
    %2246 = vmatpush1.bf16.msra.mxu0 %v2212
    %2247 = vmatprep.subr.bf16.mxu0 0
    %2248 = vmatpush1.bf16.msra.mxu0 %v2213
    %2249 = vmatprep.subr.bf16.mxu0 0
    %2250 = vmatpush1.bf16.msra.mxu0 %v2214
    %2251 = vmatprep.subr.bf16.mxu0 0
    %2252 = vmatpush1.bf16.msra.mxu0 %v2215
    %2253 = vmatprep.subr.bf16.mxu0 0
    %2254 = vmatpush1.bf16.msra.mxu0 %v2216
    %2255 = vmatprep.subr.bf16.mxu0 0
    %2256 = vmatpush1.bf16.msra.mxu0 %v2217
    %2257 = vmatprep.subr.bf16.mxu0 0
    %2258 = vmatpush1.bf16.msra.mxu0 %v2218
    %2259 = vmatprep.subr.bf16.mxu0 0
    %2260 = vmatpush1.bf16.msra.mxu0 %v2219
    %2261 = vmatprep.subr.bf16.mxu0 0
    %2262 = vmatpush1.bf16.msra.mxu0 %v2220
    %2263 = vmatprep.subr.bf16.mxu0 0
    %2264 = vmatpush1.bf16.msra.mxu0 %v2221
    %2265 = vmatprep.subr.bf16.mxu0 0
    %2266 = vmatpush1.bf16.msra.mxu0 %v2222
    %2267 = vmatprep.subr.bf16.mxu0 0
    %2268 = vmatpush1.bf16.msra.mxu0 %v2223
    %2269 = vmatprep.subr.bf16.mxu0 0
    %2270 = vmatpush1.bf16.msra.mxu0 %v2224
    %2271 = vmatprep.subr.bf16.mxu0 0
    %2272 = vmatpush1.bf16.msra.mxu0 %v2225
    %2273 = vmatprep.subr.bf16.mxu0 0
    %2274 = vmatpush1.bf16.msra.mxu0 %v2226
    %2275 = vmatprep.mubr.bf16.mxu0 %v2107
    %2276 = vmatmul.mubr.bf16.gmra.mrb[0].mxu0 %v2106
    %v2277 = vpop.f32.mrb[0].mxu0
    %v2278 = vadd.f32 %v2145, %v2277
    %v2279 = vpop.f32.mrb[0].mxu0
    %v2280 = vpop.f32.mrb[0].mxu0
    %v2281 = vadd.f32 %v2145, %v2280
    %v2282 = vpop.f32.mrb[0].mxu0
    %2283 = vdwg.mxu0
    %2284 = vst [vmem:[%s7] sm:$0xff] %v2278
    %2285 = vst [vmem:[%s7 + $0x8] sm:$0xff] %v2281
    // Predicated region
    $region34: #{_lambda_.1} parent=1 // pred_check
      _
    $region35: #{_lambda_.1} parent=1 // pred_check_branch
      %2287 = sbr.rel (0) target = $region37
    $region36: #{_lambda_.1} parent=1 // pred_region
      _
    $region37: #{_lambda_.1} parent=1 // pred_fallthru
      _
    // Predicated region
    $region38: #{_lambda_.1} parent=1 // pred_check
      _
    $region39: #{_lambda_.1} parent=1 // pred_check_branch
      %2289 = sbr.rel (0) target = $region41
    $region40: #{_lambda_.1} parent=1 // pred_region
      _
    $region41: #{_lambda_.1} parent=1 // pred_fallthru
      _
    %2290 = vsyncpa [#allocation3], 1

</llo_original>
